<compile_context>
chip_gen: v7x
topology: tpu7x:2x2x1
jax: 0.10.0
libtpu: 0.0.40
codegen_flags: <defaults>
</compile_context>

<pallas_src>
import functools

import jax
import jax.numpy as jnp
from jax.experimental import pallas as pl
from jax.experimental.pallas import tpu as pltpu


def _mlp_kernel(x_ref, w1_ref, b1_ref, w2_ref, b2_ref, o_ref, *, precision):
    # fc1 (packed / block-diagonal): [TB, P*D] @ [P*D, P*H], f32 accumulate.
    x = x_ref[...].astype(w1_ref.dtype)          # in-kernel MXU-operand cast only
    h = jnp.dot(x, w1_ref[...],
                preferred_element_type=jnp.float32, precision=precision)
    h = jnp.maximum(h + b1_ref[...], 0.0)        # bias + ReLU in f32
    # Dropout(p=0.3) in eval mode == identity.
    # TODO(synk): training-mode dropout (pltpu.prng_seed + prng_random_bits) not implemented.
    z = jnp.dot(h.astype(w2_ref.dtype), w2_ref[...],
                preferred_element_type=jnp.float32, precision=precision)
    z = z + b2_ref[...]
    # sigmoid(z) = 0.5*(tanh(z/2)+1): exact identity, tanh runs on the EUP slot.
    o_ref[...] = (0.5 * (jnp.tanh(0.5 * z) + 1.0)).astype(o_ref.dtype)


def _pick_pack(batch):
    """Largest lane-pack factor that divides the batch exactly (no padding)."""
    for p in (32, 8, 1):
        if batch % p == 0:
            return p
    return 1


# VMEM-safe caps on packed rows per grid step (keeps total well under the
# 32 MiB scoped limit even on v7x, incl. double buffers + intermediates).
_TBP_CAP = {32: 512, 8: 1024, 1: 4096}


def _pick_tbp(bp, pack, d, itemsize, block_b):
    """Packed rows per grid step."""
    tbp = max(block_b // pack, 8)
    tbp = min(tbp, _TBP_CAP[pack])
    tbp = max((tbp // 8) * 8, 8)                 # sublane-aligned
    if tbp >= bp:
        # Whole batch fits in one step.  If it is large enough that two steps
        # are still well amortized (>= ~0.5 MiB of x each), split in two so a
        # v7x megacore can put one block on each TensorCore.
        if bp >= 16 and bp * pack * d * itemsize >= (1 << 20):
            tbp = ((pl.cdiv(bp, 2) + 7) // 8) * 8
        else:
            tbp = bp
    return tbp


def mental_health_nn_forward(x, w1, b1, w2, b2, *, block_b=32768, mxu_dtype=None):
    """Fused MentalHealthNN forward.

    x : [B, input_dim] float32
    w1: [input_dim, hidden]   (transposed vs. torch fc1.weight)
    b1: [hidden]
    w2: [hidden, output]      (transposed vs. torch fc2.weight)
    b2: [output]
    returns sigmoid(relu(x @ w1 + b1) @ w2 + b2)  as [B, output] float32.
    """
    B, D = x.shape
    H = w1.shape[1]
    O = w2.shape[1]

    # ---- lane-dense packing (free reshape, block-diagonal weights) ---------
    P = _pick_pack(B)
    Bp, PD, PH, PO = B // P, P * D, P * H, P * O

    # Rows of D contiguous f32 -> layout-preserving reshape, no pad, no extra
    # HBM pass over x.
    xp = x.reshape(Bp, PD)

    eye = jnp.eye(P, dtype=w1.dtype)
    w1p = jnp.kron(eye, w1)                      # [P*D, P*H] block-diagonal
    w2p = jnp.kron(eye, w2)                      # [P*H, P*O] block-diagonal
    if mxu_dtype is not None:
        # Only the tiny, VMEM-resident weights are narrowed on the host;
        # x stays as produced and is cast inside the kernel.
        w1p = w1p.astype(mxu_dtype)
        w2p = w2p.astype(mxu_dtype)
    b1p = jnp.tile(b1.astype(jnp.float32), P).reshape(1, PH)
    b2p = jnp.tile(b2.astype(jnp.float32), P).reshape(1, PO)

    # ---- batch tiling -------------------------------------------------------
    tbp = _pick_tbp(Bp, P, D, x.dtype.itemsize, block_b)
    grid = (pl.cdiv(Bp, tbp),)                   # ragged last block -> masked

    precision = (jax.lax.Precision.HIGHEST if mxu_dtype is None
                 else jax.lax.Precision.DEFAULT)
    kernel = functools.partial(_mlp_kernel, precision=precision)

    wsize = w1p.dtype.itemsize
    cost = pl.CostEstimate(
        flops=2 * Bp * PD * PH + 2 * Bp * PH * PO,
        transcendentals=Bp * PO,
        bytes_accessed=(Bp * PD * x.dtype.itemsize          # x read
                        + (PD * PH + PH * PO) * wsize       # weights
                        + (PH + PO) * 4                     # biases
                        + Bp * PO * 4),                     # out write
    )

    out = pl.pallas_call(
        kernel,
        out_shape=jax.ShapeDtypeStruct((Bp, PO), jnp.float32),
        grid=grid,
        in_specs=[
            pl.BlockSpec((tbp, PD), lambda i: (i, 0)),   # x: streamed tiles
            pl.BlockSpec((PD, PH), lambda i: (0, 0)),    # w1: VMEM-resident
            pl.BlockSpec((1, PH), lambda i: (0, 0)),     # b1: VMEM-resident
            pl.BlockSpec((PH, PO), lambda i: (0, 0)),    # w2: VMEM-resident
            pl.BlockSpec((1, PO), lambda i: (0, 0)),     # b2: VMEM-resident
        ],
        out_specs=pl.BlockSpec((tbp, PO), lambda i: (i, 0)),
        compiler_params=pltpu.CompilerParams(
            dimension_semantics=("parallel",),           # shard batch on v7x 2-TC
            vmem_limit_bytes=32 * 1024 * 1024),
        cost_estimate=cost,
    )(xp, w1p, b1p, w2p, b2p)

    return out.reshape(B, O)


def reference_forward(x, w1, b1, w2, b2):
    h = jnp.maximum(x @ w1 + b1, 0.0)
    return jax.nn.sigmoid(h @ w2 + b2)


if __name__ == "__main__":
    # Shapes consistent with the module: input_dim=16, hidden=32, output_dim=4.
    input_dim, hidden_dim, output_dim = 16, 32, 4

    key = jax.random.PRNGKey(0)
    kx, k1, k2, k3, k4 = jax.random.split(key, 5)
    w1 = jax.random.normal(k1, (input_dim, hidden_dim), dtype=jnp.float32) * 0.1
    b1 = jax.random.normal(k2, (hidden_dim,), dtype=jnp.float32) * 0.1
    w2 = jax.random.normal(k3, (hidden_dim, output_dim), dtype=jnp.float32) * 0.1
    b2 = jax.random.normal(k4, (output_dim,), dtype=jnp.float32) * 0.1

    # 1) Small batch: pack=8, single grid step.
    x_small = jax.random.normal(kx, (8, input_dim), dtype=jnp.float32)
    out_small = mental_health_nn_forward(x_small, w1, b1, w2, b2)
    jax.block_until_ready(out_small)
    ref_small = reference_forward(x_small, w1, b1, w2, b2)
    assert out_small.shape == (8, output_dim)
    assert jnp.allclose(out_small, ref_small, atol=1e-4, rtol=1e-4)

    # 2) Batch divisible by 32: pack=32 fully lane-dense path, 4 grid steps
    #    with weights VMEM-resident across steps.
    x_big = jax.random.normal(jax.random.PRNGKey(1), (1024, input_dim),
                              dtype=jnp.float32)
    out_big = mental_health_nn_forward(x_big, w1, b1, w2, b2, block_b=256)
    ref_big = reference_forward(x_big, w1, b1, w2, b2)
    assert out_big.shape == (1024, output_dim)
    assert jnp.allclose(out_big, ref_big, atol=1e-4, rtol=1e-4)

    # 3) Ragged packed grid (pack=8, Bp=125, 2 steps incl. a masked tail
    #    block) in f32 and with bf16 MXU operands (v6e/v7x path).
    x_rag = jax.random.normal(jax.random.PRNGKey(2), (1000, input_dim),
                              dtype=jnp.float32)
    out_rag = mental_health_nn_forward(x_rag, w1, b1, w2, b2, block_b=512)
    out_bf16 = mental_health_nn_forward(x_rag, w1, b1, w2, b2, block_b=512,
                                        mxu_dtype=jnp.bfloat16)
    ref_rag = reference_forward(x_rag, w1, b1, w2, b2)
    assert jnp.allclose(out_rag, ref_rag, atol=1e-4, rtol=1e-4)
    assert jnp.allclose(out_bf16, ref_rag, atol=2e-2, rtol=2e-2)

    # 4) Batch not divisible by 8: unpacked fallback, no padding, one block.
    x_odd = jax.random.normal(jax.random.PRNGKey(3), (13, input_dim),
                              dtype=jnp.float32)
    out_odd = mental_health_nn_forward(x_odd, w1, b1, w2, b2)
    ref_odd = reference_forward(x_odd, w1, b1, w2, b2)
    assert jnp.allclose(out_odd, ref_odd, atol=1e-4, rtol=1e-4)

    jax.block_until_ready((out_small, out_big, out_rag, out_bf16, out_odd))
    print("KERNEL_OK")
</pallas_src>

<mosaic_0001>
module attributes {stable_mosaic.version = 11 : i64} {
  func.func @_mlp_kernel(%arg0: i32, %arg1: memref<1x128xf32, #tpu.memory_space<vmem>>, %arg2: memref<128x256xf32, #tpu.memory_space<vmem>>, %arg3: memref<1x256xf32, #tpu.memory_space<vmem>>, %arg4: memref<256x32xf32, #tpu.memory_space<vmem>>, %arg5: memref<1x32xf32, #tpu.memory_space<vmem>>, %arg6: memref<1x32xf32, #tpu.memory_space<vmem>>) attributes {dimension_semantics = [#tpu.dimension_semantics<parallel>], iteration_bounds = array<i64: 1>, scalar_prefetch = 0 : i64, scratch_operands = 0 : i64, tpu.core_type = #tpu.core_type<tc>, window_params = [{transform_indices = @transform_0, window_bounds = array<i64: 1, 128>}, {pipeline_mode = #tpu.pipeline_mode<synchronous>, transform_indices = @transform_1, window_bounds = array<i64: 128, 256>}, {pipeline_mode = #tpu.pipeline_mode<synchronous>, transform_indices = @transform_2, window_bounds = array<i64: 1, 256>}, {pipeline_mode = #tpu.pipeline_mode<synchronous>, transform_indices = @transform_3, window_bounds = array<i64: 256, 32>}, {pipeline_mode = #tpu.pipeline_mode<synchronous>, transform_indices = @transform_4, window_bounds = array<i64: 1, 32>}, {transform_indices = @transform_5, window_bounds = array<i64: 1, 32>}]} {
    %c0 = arith.constant 0 : index
    %c0_0 = arith.constant 0 : index
    %0 = vector.load %arg1[%c0, %c0_0] : memref<1x128xf32, #tpu.memory_space<vmem>>, vector<1x128xf32>
    %c0_1 = arith.constant 0 : index
    %c0_2 = arith.constant 0 : index
    %1 = vector.load %arg2[%c0_1, %c0_2] : memref<128x256xf32, #tpu.memory_space<vmem>>, vector<128x256xf32>
    %cst = arith.constant dense<0.000000e+00> : vector<1x256xf32>
    %2 = tpu.matmul %0, %1, %cst {dimension_numbers = #tpu.dot_dimension_numbers<[1], [0], [0], [1], [0, 0, 1, 1], [], []>, precision = #tpu.contract_precision<fp32>} : vector<1x128xf32>, vector<128x256xf32>, vector<1x256xf32> -> vector<1x256xf32>
    %c0_3 = arith.constant 0 : index
    %c0_4 = arith.constant 0 : index
    %3 = vector.load %arg3[%c0_3, %c0_4] : memref<1x256xf32, #tpu.memory_space<vmem>>, vector<1x256xf32>
    %4 = arith.addf %2, %3 : vector<1x256xf32>
    %cst_5 = arith.constant 0.000000e+00 : f32
    %5 = vector.broadcast %cst_5 : f32 to vector<1x256xf32>
    %6 = arith.maximumf %4, %5 : vector<1x256xf32>
    %c0_6 = arith.constant 0 : index
    %c0_7 = arith.constant 0 : index
    %7 = vector.load %arg4[%c0_6, %c0_7] : memref<256x32xf32, #tpu.memory_space<vmem>>, vector<256x32xf32>
    %cst_8 = arith.constant dense<0.000000e+00> : vector<1x32xf32>
    %8 = tpu.matmul %6, %7, %cst_8 {dimension_numbers = #tpu.dot_dimension_numbers<[1], [0], [0], [1], [0, 0, 1, 1], [], []>, precision = #tpu.contract_precision<fp32>} : vector<1x256xf32>, vector<256x32xf32>, vector<1x32xf32> -> vector<1x32xf32>
    %c0_9 = arith.constant 0 : index
    %c0_10 = arith.constant 0 : index
    %9 = vector.load %arg5[%c0_9, %c0_10] : memref<1x32xf32, #tpu.memory_space<vmem>>, vector<1x32xf32>
    %10 = arith.addf %8, %9 : vector<1x32xf32>
    %cst_11 = arith.constant 5.000000e-01 : f32
    %11 = vector.broadcast %cst_11 : f32 to vector<1x32xf32>
    %12 = arith.mulf %11, %10 : vector<1x32xf32>
    %13 = math.tanh %12 : vector<1x32xf32>
    %cst_12 = arith.constant 1.000000e+00 : f32
    %14 = vector.broadcast %cst_12 : f32 to vector<1x32xf32>
    %15 = arith.addf %13, %14 : vector<1x32xf32>
    %cst_13 = arith.constant 5.000000e-01 : f32
    %16 = vector.broadcast %cst_13 : f32 to vector<1x32xf32>
    %17 = arith.mulf %16, %15 : vector<1x32xf32>
    %c0_14 = arith.constant 0 : index
    %c0_15 = arith.constant 0 : index
    %18 = vector.load %arg6[%c0_14, %c0_15] : memref<1x32xf32, #tpu.memory_space<vmem>>, vector<1x32xf32>
    tpu.vector_store %arg6[%c0_14, %c0_15], %17 {strides = array<i32>} : memref<1x32xf32, #tpu.memory_space<vmem>>, vector<1x32xf32>,
    return
  }
  func.func @transform_0(%arg0: i32) -> (i32, i32) {
    %c0_i32 = arith.constant 0 : i32
    %c0_i32_0 = arith.constant 0 : i32
    return %arg0, %c0_i32 : i32, i32
  }
  func.func @transform_1(%arg0: i32) -> (i32, i32) {
    %c0_i32 = arith.constant 0 : i32
    %c0_i32_0 = arith.constant 0 : i32
    %c0_i32_1 = arith.constant 0 : i32
    return %c0_i32, %c0_i32_0 : i32, i32
  }
  func.func @transform_2(%arg0: i32) -> (i32, i32) {
    %c0_i32 = arith.constant 0 : i32
    %c0_i32_0 = arith.constant 0 : i32
    %c0_i32_1 = arith.constant 0 : i32
    return %c0_i32, %c0_i32_0 : i32, i32
  }
  func.func @transform_3(%arg0: i32) -> (i32, i32) {
    %c0_i32 = arith.constant 0 : i32
    %c0_i32_0 = arith.constant 0 : i32
    %c0_i32_1 = arith.constant 0 : i32
    return %c0_i32, %c0_i32_0 : i32, i32
  }
  func.func @transform_4(%arg0: i32) -> (i32, i32) {
    %c0_i32 = arith.constant 0 : i32
    %c0_i32_0 = arith.constant 0 : i32
    %c0_i32_1 = arith.constant 0 : i32
    return %c0_i32, %c0_i32_0 : i32, i32
  }
  func.func @transform_5(%arg0: i32) -> (i32, i32) {
    %c0_i32 = arith.constant 0 : i32
    %c0_i32_0 = arith.constant 0 : i32
    return %arg0, %c0_i32 : i32, i32
  }
}

</mosaic_0001>

<llo_original>
// kernel: tpu_custom_call.1
$region0: #{tpu_custom_call.1}
  #allocation0 [shape = 'u32[]', space=smem, size = 0x4, offset = 0x4, fixed_abs, tag = 'smem constant byte address 0x4 - core index']
  #allocation1 [shape = 'u32[144,128]{1,0:T(1,128)}', space=vmem, size = 0x12000, scoped, tag = 'internal scratch']
  %s0 = inlined_call_operand.vmem [shape: f32[1,128], index: 0, kind: input, shape index: {}]
  %s1 = inlined_call_operand.vmem [shape: f32[128,256], index: 1, kind: input, shape index: {}]
  %s2 = inlined_call_operand.vmem [shape: f32[1,256], index: 2, kind: input, shape index: {}]
  %s3 = inlined_call_operand.vmem [shape: f32[256,32], index: 3, kind: input, shape index: {}]
  %s4 = inlined_call_operand.vmem [shape: f32[1,32], index: 4, kind: input, shape index: {}]
  %s5 = inlined_call_operand.hbm [shape: f32[1,32], index: 5, kind: output, shape index: {}]
  %s6 = sld [smem:[#allocation0]]
  $region30: #{tpu_custom_call.1} parent=0
    _
  %s8 = ssub.s32 1, %s6
  %s9 = scalar_select 0, %s8, %s6
  $region1: #{tpu_custom_call.1} parent=0
    #allocation2 [shape = 'u8[512]{0}', space=vmem, size = 0x400, scoped, tag = 'output window, operand 0, single buffered']
    #allocation3 [shape = 's32[1]{0}', space=sflag, size = 0x4, scoped, tag = 'scoped memory for tpu_custom_call.1']
    %10 = vsyncpa [#allocation3], 0
    // Predicated region
    $region2: #{tpu_custom_call.1} parent=1 // pred_check
      _
    $region3: #{tpu_custom_call.1} parent=1 // pred_check_branch
      %12 = sbr.rel (0) target = $region5
    $region4: #{tpu_custom_call.1} parent=1 // pred_region
      _
    $region5: #{tpu_custom_call.1} parent=1 // pred_fallthru
      _
    // Predicated region
    $region6: #{tpu_custom_call.1} parent=1 // pred_check
      _
    $region7: #{tpu_custom_call.1} parent=1 // pred_check_branch
      %14 = sbr.rel (0) target = $region9
    $region8: #{tpu_custom_call.1} parent=1 // pred_region
      _
    $region9: #{tpu_custom_call.1} parent=1 // pred_fallthru
      _
    // Predicated region
    $region10: #{tpu_custom_call.1} parent=1 // pred_check
      _
    $region11: #{tpu_custom_call.1} parent=1 // pred_check_branch
      %16 = sbr.rel (0) target = $region13
    $region12: #{tpu_custom_call.1} parent=1 // pred_region
      _
    $region13: #{tpu_custom_call.1} parent=1 // pred_fallthru
      _
    // Predicated region
    $region14: #{tpu_custom_call.1} parent=1 // pred_check
      _
    $region15: #{tpu_custom_call.1} parent=1 // pred_check_branch
      %18 = sbr.rel (0) target = $region17
    $region16: #{tpu_custom_call.1} parent=1 // pred_region
      _
    $region17: #{tpu_custom_call.1} parent=1 // pred_fallthru
      _
    // Predicated region
    $region18: #{tpu_custom_call.1} parent=1 // pred_check
      _
    $region19: #{tpu_custom_call.1} parent=1 // pred_check_branch
      %20 = sbr.rel (0) target = $region21
    $region20: #{tpu_custom_call.1} parent=1 // pred_region
      _
    $region21: #{tpu_custom_call.1} parent=1 // pred_fallthru
      _
    %v21 = vld [vmem:[%s0] sm:$0x1]
    %v22 = vld [vmem:[%s1] sm:$0xff]
    %v23 = vld [vmem:[%s1 + $0x8] sm:$0xff]
    %v24 = vld [vmem:[%s1 + $0x10] sm:$0xff]
    %v25 = vld [vmem:[%s1 + $0x18] sm:$0xff]
    %v26 = vld [vmem:[%s1 + $0x20] sm:$0xff]
    %v27 = vld [vmem:[%s1 + $0x28] sm:$0xff]
    %v28 = vld [vmem:[%s1 + $0x30] sm:$0xff]
    %v29 = vld [vmem:[%s1 + $0x38] sm:$0xff]
    %v30 = vld [vmem:[%s1 + $0x40] sm:$0xff]
    %v31 = vld [vmem:[%s1 + $0x48] sm:$0xff]
    %v32 = vld [vmem:[%s1 + $0x50] sm:$0xff]
    %v33 = vld [vmem:[%s1 + $0x58] sm:$0xff]
    %v34 = vld [vmem:[%s1 + $0x60] sm:$0xff]
    %v35 = vld [vmem:[%s1 + $0x68] sm:$0xff]
    %v36 = vld [vmem:[%s1 + $0x70] sm:$0xff]
    %v37 = vld [vmem:[%s1 + $0x78] sm:$0xff]
    %v38 = vld [vmem:[%s1 + $0x80] sm:$0xff]
    %v39 = vld [vmem:[%s1 + $0x88] sm:$0xff]
    %v40 = vld [vmem:[%s1 + $0x90] sm:$0xff]
    %v41 = vld [vmem:[%s1 + $0x98] sm:$0xff]
    %v42 = vld [vmem:[%s1 + $0xa0] sm:$0xff]
    %v43 = vld [vmem:[%s1 + $0xa8] sm:$0xff]
    %v44 = vld [vmem:[%s1 + $0xb0] sm:$0xff]
    %v45 = vld [vmem:[%s1 + $0xb8] sm:$0xff]
    %v46 = vld [vmem:[%s1 + $0xc0] sm:$0xff]
    %v47 = vld [vmem:[%s1 + $0xc8] sm:$0xff]
    %v48 = vld [vmem:[%s1 + $0xd0] sm:$0xff]
    %v49 = vld [vmem:[%s1 + $0xd8] sm:$0xff]
    %v50 = vld [vmem:[%s1 + $0xe0] sm:$0xff]
    %v51 = vld [vmem:[%s1 + $0xe8] sm:$0xff]
    %v52 = vld [vmem:[%s1 + $0xf0] sm:$0xff]
    %v53 = vld [vmem:[%s1 + $0xf8] sm:$0xff]
    %v54 = vld [vmem:[%s2] sm:$0x3]
    %v56 = vlaneseq
    %v57 = vshrl.u32 %v56, 7
    %v58 = vsub.s32 0, %v57
    %v59 = vrot.slane %v54, %v58
    %v60 = vlaneseq
    %v61 = vshrl.u32 %v60, 7
    %v62 = vsub.s32 1, %v61
    %v63 = vrot.slane %v54, %v62
    %v66 = vand.u32 %v23, 4294901760
    %67 = vmatprep.subr.mxu0 %v66
    %v68 = vand.u32 %v22, 4294901760
    %69 = vmatpush1.msra.mxu0 %v68
    %v70 = vand.u32 %v25, 4294901760
    %71 = vmatprep.subr.mxu0 %v70
    %v72 = vand.u32 %v24, 4294901760
    %73 = vmatpush1.msra.mxu0 %v72
    %v74 = vand.u32 %v27, 4294901760
    %75 = vmatprep.subr.mxu0 %v74
    %v76 = vand.u32 %v26, 4294901760
    %77 = vmatpush1.msra.mxu0 %v76
    %v78 = vand.u32 %v29, 4294901760
    %79 = vmatprep.subr.mxu0 %v78
    %v80 = vand.u32 %v28, 4294901760
    %81 = vmatpush1.msra.mxu0 %v80
    %v82 = vand.u32 %v31, 4294901760
    %83 = vmatprep.subr.mxu0 %v82
    %v84 = vand.u32 %v30, 4294901760
    %85 = vmatpush1.msra.mxu0 %v84
    %v86 = vand.u32 %v33, 4294901760
    %87 = vmatprep.subr.mxu0 %v86
    %v88 = vand.u32 %v32, 4294901760
    %89 = vmatpush1.msra.mxu0 %v88
    %v90 = vand.u32 %v35, 4294901760
    %91 = vmatprep.subr.mxu0 %v90
    %v92 = vand.u32 %v34, 4294901760
    %93 = vmatpush1.msra.mxu0 %v92
    %v94 = vand.u32 %v37, 4294901760
    %95 = vmatprep.subr.mxu0 %v94
    %v96 = vand.u32 %v36, 4294901760
    %97 = vmatpush1.msra.mxu0 %v96
    %v98 = vand.u32 %v39, 4294901760
    %99 = vmatprep.subr.mxu0 %v98
    %v100 = vand.u32 %v38, 4294901760
    %101 = vmatpush1.msra.mxu0 %v100
    %v102 = vand.u32 %v41, 4294901760
    %103 = vmatprep.subr.mxu0 %v102
    %v104 = vand.u32 %v40, 4294901760
    %105 = vmatpush1.msra.mxu0 %v104
    %v106 = vand.u32 %v43, 4294901760
    %107 = vmatprep.subr.mxu0 %v106
    %v108 = vand.u32 %v42, 4294901760
    %109 = vmatpush1.msra.mxu0 %v108
    %v110 = vand.u32 %v45, 4294901760
    %111 = vmatprep.subr.mxu0 %v110
    %v112 = vand.u32 %v44, 4294901760
    %113 = vmatpush1.msra.mxu0 %v112
    %v114 = vand.u32 %v47, 4294901760
    %115 = vmatprep.subr.mxu0 %v114
    %v116 = vand.u32 %v46, 4294901760
    %117 = vmatpush1.msra.mxu0 %v116
    %v118 = vand.u32 %v49, 4294901760
    %119 = vmatprep.subr.mxu0 %v118
    %v120 = vand.u32 %v48, 4294901760
    %121 = vmatpush1.msra.mxu0 %v120
    %v122 = vand.u32 %v51, 4294901760
    %123 = vmatprep.subr.mxu0 %v122
    %v124 = vand.u32 %v50, 4294901760
    %125 = vmatpush1.msra.mxu0 %v124
    %v126 = vand.u32 %v53, 4294901760
    %127 = vmatprep.subr.mxu0 %v126
    %v128 = vand.u32 %v52, 4294901760
    %129 = vmatpush1.msra.mxu0 %v128
    %130 = vmatprep.subr.mxu0 0.0
    %131 = vmatpush1.msra.mxu0 0.0
    %132 = vmatprep.subr.mxu0 0.0
    %133 = vmatpush1.msra.mxu0 0.0
    %134 = vmatprep.subr.mxu0 0.0
    %135 = vmatpush1.msra.mxu0 0.0
    %136 = vmatprep.subr.mxu0 0.0
    %137 = vmatpush1.msra.mxu0 0.0
    %138 = vmatprep.subr.mxu0 0.0
    %139 = vmatpush1.msra.mxu0 0.0
    %140 = vmatprep.subr.mxu0 0.0
    %141 = vmatpush1.msra.mxu0 0.0
    %142 = vmatprep.subr.mxu0 0.0
    %143 = vmatpush1.msra.mxu0 0.0
    %144 = vmatprep.subr.mxu0 0.0
    %145 = vmatpush1.msra.mxu0 0.0
    %146 = vmatprep.subr.mxu0 0.0
    %147 = vmatpush1.msra.mxu0 0.0
    %148 = vmatprep.subr.mxu0 0.0
    %149 = vmatpush1.msra.mxu0 0.0
    %150 = vmatprep.subr.mxu0 0.0
    %151 = vmatpush1.msra.mxu0 0.0
    %152 = vmatprep.subr.mxu0 0.0
    %153 = vmatpush1.msra.mxu0 0.0
    %154 = vmatprep.subr.mxu0 0.0
    %155 = vmatpush1.msra.mxu0 0.0
    %156 = vmatprep.subr.mxu0 0.0
    %157 = vmatpush1.msra.mxu0 0.0
    %158 = vmatprep.subr.mxu0 0.0
    %159 = vmatpush1.msra.mxu0 0.0
    %160 = vmatprep.subr.mxu0 0.0
    %161 = vmatpush1.msra.mxu0 0.0
    %162 = vmatprep.mubr.f32.mxu0 0.0
    %v163 = vand.u32 %v21, 4294901760
    %v164 = vsub.f32 %v21, %v163
    %v165 = vand.u32 %v164, 4294901760
    %v166 = vsub.f32 %v164, %v165
    %v167 = vand.u32 %v166, 4294901760
    %168 = vmatmul.mubr.f32.gmra.mrb[0].mxu0 %v167
    %v169 = vpop.f32.mrb[0].mxu0
    %v170 = vadd.f32 %v59, %v169
    %v171 = vpop.f32.mrb[0].mxu0
    %v172 = vadd.f32 %v63, %v171
    %173 = vdwg.mxu0
    %v174 = vand.u32 %v23, 4294901760
    %v175 = vsub.f32 %v23, %v174
    %v176 = vand.u32 %v175, 4294901760
    %v177 = vsub.f32 %v175, %v176
    %v178 = vand.u32 %v177, 4294901760
    %179 = vmatprep.subr.mxu0 %v178
    %v180 = vand.u32 %v22, 4294901760
    %v181 = vsub.f32 %v22, %v180
    %v182 = vand.u32 %v181, 4294901760
    %v183 = vsub.f32 %v181, %v182
    %v184 = vand.u32 %v183, 4294901760
    %185 = vmatpush1.msra.mxu0 %v184
    %v186 = vand.u32 %v25, 4294901760
    %v187 = vsub.f32 %v25, %v186
    %v188 = vand.u32 %v187, 4294901760
    %v189 = vsub.f32 %v187, %v188
    %v190 = vand.u32 %v189, 4294901760
    %191 = vmatprep.subr.mxu0 %v190
    %v192 = vand.u32 %v24, 4294901760
    %v193 = vsub.f32 %v24, %v192
    %v194 = vand.u32 %v193, 4294901760
    %v195 = vsub.f32 %v193, %v194
    %v196 = vand.u32 %v195, 4294901760
    %197 = vmatpush1.msra.mxu0 %v196
    %v198 = vand.u32 %v27, 4294901760
    %v199 = vsub.f32 %v27, %v198
    %v200 = vand.u32 %v199, 4294901760
    %v201 = vsub.f32 %v199, %v200
    %v202 = vand.u32 %v201, 4294901760
    %203 = vmatprep.subr.mxu0 %v202
    %v204 = vand.u32 %v26, 4294901760
    %v205 = vsub.f32 %v26, %v204
    %v206 = vand.u32 %v205, 4294901760
    %v207 = vsub.f32 %v205, %v206
    %v208 = vand.u32 %v207, 4294901760
    %209 = vmatpush1.msra.mxu0 %v208
    %v210 = vand.u32 %v29, 4294901760
    %v211 = vsub.f32 %v29, %v210
    %v212 = vand.u32 %v211, 4294901760
    %v213 = vsub.f32 %v211, %v212
    %v214 = vand.u32 %v213, 4294901760
    %215 = vmatprep.subr.mxu0 %v214
    %v216 = vand.u32 %v28, 4294901760
    %v217 = vsub.f32 %v28, %v216
    %v218 = vand.u32 %v217, 4294901760
    %v219 = vsub.f32 %v217, %v218
    %v220 = vand.u32 %v219, 4294901760
    %221 = vmatpush1.msra.mxu0 %v220
    %v222 = vand.u32 %v31, 4294901760
    %v223 = vsub.f32 %v31, %v222
    %v224 = vand.u32 %v223, 4294901760
    %v225 = vsub.f32 %v223, %v224
    %v226 = vand.u32 %v225, 4294901760
    %227 = vmatprep.subr.mxu0 %v226
    %v228 = vand.u32 %v30, 4294901760
    %v229 = vsub.f32 %v30, %v228
    %v230 = vand.u32 %v229, 4294901760
    %v231 = vsub.f32 %v229, %v230
    %v232 = vand.u32 %v231, 4294901760
    %233 = vmatpush1.msra.mxu0 %v232
    %v234 = vand.u32 %v33, 4294901760
    %v235 = vsub.f32 %v33, %v234
    %v236 = vand.u32 %v235, 4294901760
    %v237 = vsub.f32 %v235, %v236
    %v238 = vand.u32 %v237, 4294901760
    %239 = vmatprep.subr.mxu0 %v238
    %v240 = vand.u32 %v32, 4294901760
    %v241 = vsub.f32 %v32, %v240
    %v242 = vand.u32 %v241, 4294901760
    %v243 = vsub.f32 %v241, %v242
    %v244 = vand.u32 %v243, 4294901760
    %245 = vmatpush1.msra.mxu0 %v244
    %v246 = vand.u32 %v35, 4294901760
    %v247 = vsub.f32 %v35, %v246
    %v248 = vand.u32 %v247, 4294901760
    %v249 = vsub.f32 %v247, %v248
    %v250 = vand.u32 %v249, 4294901760
    %251 = vmatprep.subr.mxu0 %v250
    %v252 = vand.u32 %v34, 4294901760
    %v253 = vsub.f32 %v34, %v252
    %v254 = vand.u32 %v253, 4294901760
    %v255 = vsub.f32 %v253, %v254
    %v256 = vand.u32 %v255, 4294901760
    %257 = vmatpush1.msra.mxu0 %v256
    %v258 = vand.u32 %v37, 4294901760
    %v259 = vsub.f32 %v37, %v258
    %v260 = vand.u32 %v259, 4294901760
    %v261 = vsub.f32 %v259, %v260
    %v262 = vand.u32 %v261, 4294901760
    %263 = vmatprep.subr.mxu0 %v262
    %v264 = vand.u32 %v36, 4294901760
    %v265 = vsub.f32 %v36, %v264
    %v266 = vand.u32 %v265, 4294901760
    %v267 = vsub.f32 %v265, %v266
    %v268 = vand.u32 %v267, 4294901760
    %269 = vmatpush1.msra.mxu0 %v268
    %v270 = vand.u32 %v39, 4294901760
    %v271 = vsub.f32 %v39, %v270
    %v272 = vand.u32 %v271, 4294901760
    %v273 = vsub.f32 %v271, %v272
    %v274 = vand.u32 %v273, 4294901760
    %275 = vmatprep.subr.mxu0 %v274
    %v276 = vand.u32 %v38, 4294901760
    %v277 = vsub.f32 %v38, %v276
    %v278 = vand.u32 %v277, 4294901760
    %v279 = vsub.f32 %v277, %v278
    %v280 = vand.u32 %v279, 4294901760
    %281 = vmatpush1.msra.mxu0 %v280
    %v282 = vand.u32 %v41, 4294901760
    %v283 = vsub.f32 %v41, %v282
    %v284 = vand.u32 %v283, 4294901760
    %v285 = vsub.f32 %v283, %v284
    %v286 = vand.u32 %v285, 4294901760
    %287 = vmatprep.subr.mxu0 %v286
    %v288 = vand.u32 %v40, 4294901760
    %v289 = vsub.f32 %v40, %v288
    %v290 = vand.u32 %v289, 4294901760
    %v291 = vsub.f32 %v289, %v290
    %v292 = vand.u32 %v291, 4294901760
    %293 = vmatpush1.msra.mxu0 %v292
    %v294 = vand.u32 %v43, 4294901760
    %v295 = vsub.f32 %v43, %v294
    %v296 = vand.u32 %v295, 4294901760
    %v297 = vsub.f32 %v295, %v296
    %v298 = vand.u32 %v297, 4294901760
    %299 = vmatprep.subr.mxu0 %v298
    %v300 = vand.u32 %v42, 4294901760
    %v301 = vsub.f32 %v42, %v300
    %v302 = vand.u32 %v301, 4294901760
    %v303 = vsub.f32 %v301, %v302
    %v304 = vand.u32 %v303, 4294901760
    %305 = vmatpush1.msra.mxu0 %v304
    %v306 = vand.u32 %v45, 4294901760
    %v307 = vsub.f32 %v45, %v306
    %v308 = vand.u32 %v307, 4294901760
    %v309 = vsub.f32 %v307, %v308
    %v310 = vand.u32 %v309, 4294901760
    %311 = vmatprep.subr.mxu0 %v310
    %v312 = vand.u32 %v44, 4294901760
    %v313 = vsub.f32 %v44, %v312
    %v314 = vand.u32 %v313, 4294901760
    %v315 = vsub.f32 %v313, %v314
    %v316 = vand.u32 %v315, 4294901760
    %317 = vmatpush1.msra.mxu0 %v316
    %v318 = vand.u32 %v47, 4294901760
    %v319 = vsub.f32 %v47, %v318
    %v320 = vand.u32 %v319, 4294901760
    %v321 = vsub.f32 %v319, %v320
    %v322 = vand.u32 %v321, 4294901760
    %323 = vmatprep.subr.mxu0 %v322
    %v324 = vand.u32 %v46, 4294901760
    %v325 = vsub.f32 %v46, %v324
    %v326 = vand.u32 %v325, 4294901760
    %v327 = vsub.f32 %v325, %v326
    %v328 = vand.u32 %v327, 4294901760
    %329 = vmatpush1.msra.mxu0 %v328
    %v330 = vand.u32 %v49, 4294901760
    %v331 = vsub.f32 %v49, %v330
    %v332 = vand.u32 %v331, 4294901760
    %v333 = vsub.f32 %v331, %v332
    %v334 = vand.u32 %v333, 4294901760
    %335 = vmatprep.subr.mxu0 %v334
    %v336 = vand.u32 %v48, 4294901760
    %v337 = vsub.f32 %v48, %v336
    %v338 = vand.u32 %v337, 4294901760
    %v339 = vsub.f32 %v337, %v338
    %v340 = vand.u32 %v339, 4294901760
    %341 = vmatpush1.msra.mxu0 %v340
    %v342 = vand.u32 %v51, 4294901760
    %v343 = vsub.f32 %v51, %v342
    %v344 = vand.u32 %v343, 4294901760
    %v345 = vsub.f32 %v343, %v344
    %v346 = vand.u32 %v345, 4294901760
    %347 = vmatprep.subr.mxu0 %v346
    %v348 = vand.u32 %v50, 4294901760
    %v349 = vsub.f32 %v50, %v348
    %v350 = vand.u32 %v349, 4294901760
    %v351 = vsub.f32 %v349, %v350
    %v352 = vand.u32 %v351, 4294901760
    %353 = vmatpush1.msra.mxu0 %v352
    %v354 = vand.u32 %v53, 4294901760
    %v355 = vsub.f32 %v53, %v354
    %v356 = vand.u32 %v355, 4294901760
    %v357 = vsub.f32 %v355, %v356
    %v358 = vand.u32 %v357, 4294901760
    %359 = vmatprep.subr.mxu0 %v358
    %v360 = vand.u32 %v52, 4294901760
    %v361 = vsub.f32 %v52, %v360
    %v362 = vand.u32 %v361, 4294901760
    %v363 = vsub.f32 %v361, %v362
    %v364 = vand.u32 %v363, 4294901760
    %365 = vmatpush1.msra.mxu0 %v364
    %366 = vmatprep.subr.mxu0 0.0
    %367 = vmatpush1.msra.mxu0 0.0
    %368 = vmatprep.subr.mxu0 0.0
    %369 = vmatpush1.msra.mxu0 0.0
    %370 = vmatprep.subr.mxu0 0.0
    %371 = vmatpush1.msra.mxu0 0.0
    %372 = vmatprep.subr.mxu0 0.0
    %373 = vmatpush1.msra.mxu0 0.0
    %374 = vmatprep.subr.mxu0 0.0
    %375 = vmatpush1.msra.mxu0 0.0
    %376 = vmatprep.subr.mxu0 0.0
    %377 = vmatpush1.msra.mxu0 0.0
    %378 = vmatprep.subr.mxu0 0.0
    %379 = vmatpush1.msra.mxu0 0.0
    %380 = vmatprep.subr.mxu0 0.0
    %381 = vmatpush1.msra.mxu0 0.0
    %382 = vmatprep.subr.mxu0 0.0
    %383 = vmatpush1.msra.mxu0 0.0
    %384 = vmatprep.subr.mxu0 0.0
    %385 = vmatpush1.msra.mxu0 0.0
    %386 = vmatprep.subr.mxu0 0.0
    %387 = vmatpush1.msra.mxu0 0.0
    %388 = vmatprep.subr.mxu0 0.0
    %389 = vmatpush1.msra.mxu0 0.0
    %390 = vmatprep.subr.mxu0 0.0
    %391 = vmatpush1.msra.mxu0 0.0
    %392 = vmatprep.subr.mxu0 0.0
    %393 = vmatpush1.msra.mxu0 0.0
    %394 = vmatprep.subr.mxu0 0.0
    %395 = vmatpush1.msra.mxu0 0.0
    %396 = vmatprep.subr.mxu0 0.0
    %397 = vmatpush1.msra.mxu0 0.0
    %398 = vmatprep.mubr.f32.mxu0 0.0
    %v399 = vand.u32 %v21, 4294901760
    %400 = vmatmul.mubr.f32.gmra.mrb[0].mxu0 %v399
    %v401 = vpop.f32.mrb[0].mxu0
    %v402 = vadd.f32 %v170, %v401
    %v403 = vpop.f32.mrb[0].mxu0
    %v404 = vadd.f32 %v172, %v403
    %405 = vdwg.mxu0
    %v406 = vand.u32 %v23, 4294901760
    %v407 = vsub.f32 %v23, %v406
    %408 = vmatprep.subr.mxu0 %v407
    %v409 = vand.u32 %v22, 4294901760
    %v410 = vsub.f32 %v22, %v409
    %411 = vmatpush1.msra.mxu0 %v410
    %v412 = vand.u32 %v25, 4294901760
    %v413 = vsub.f32 %v25, %v412
    %414 = vmatprep.subr.mxu0 %v413
    %v415 = vand.u32 %v24, 4294901760
    %v416 = vsub.f32 %v24, %v415
    %417 = vmatpush1.msra.mxu0 %v416
    %v418 = vand.u32 %v27, 4294901760
    %v419 = vsub.f32 %v27, %v418
    %420 = vmatprep.subr.mxu0 %v419
    %v421 = vand.u32 %v26, 4294901760
    %v422 = vsub.f32 %v26, %v421
    %423 = vmatpush1.msra.mxu0 %v422
    %v424 = vand.u32 %v29, 4294901760
    %v425 = vsub.f32 %v29, %v424
    %426 = vmatprep.subr.mxu0 %v425
    %v427 = vand.u32 %v28, 4294901760
    %v428 = vsub.f32 %v28, %v427
    %429 = vmatpush1.msra.mxu0 %v428
    %v430 = vand.u32 %v31, 4294901760
    %v431 = vsub.f32 %v31, %v430
    %432 = vmatprep.subr.mxu0 %v431
    %v433 = vand.u32 %v30, 4294901760
    %v434 = vsub.f32 %v30, %v433
    %435 = vmatpush1.msra.mxu0 %v434
    %v436 = vand.u32 %v33, 4294901760
    %v437 = vsub.f32 %v33, %v436
    %438 = vmatprep.subr.mxu0 %v437
    %v439 = vand.u32 %v32, 4294901760
    %v440 = vsub.f32 %v32, %v439
    %441 = vmatpush1.msra.mxu0 %v440
    %v442 = vand.u32 %v35, 4294901760
    %v443 = vsub.f32 %v35, %v442
    %444 = vmatprep.subr.mxu0 %v443
    %v445 = vand.u32 %v34, 4294901760
    %v446 = vsub.f32 %v34, %v445
    %447 = vmatpush1.msra.mxu0 %v446
    %v448 = vand.u32 %v37, 4294901760
    %v449 = vsub.f32 %v37, %v448
    %450 = vmatprep.subr.mxu0 %v449
    %v451 = vand.u32 %v36, 4294901760
    %v452 = vsub.f32 %v36, %v451
    %453 = vmatpush1.msra.mxu0 %v452
    %v454 = vand.u32 %v39, 4294901760
    %v455 = vsub.f32 %v39, %v454
    %456 = vmatprep.subr.mxu0 %v455
    %v457 = vand.u32 %v38, 4294901760
    %v458 = vsub.f32 %v38, %v457
    %459 = vmatpush1.msra.mxu0 %v458
    %v460 = vand.u32 %v41, 4294901760
    %v461 = vsub.f32 %v41, %v460
    %462 = vmatprep.subr.mxu0 %v461
    %v463 = vand.u32 %v40, 4294901760
    %v464 = vsub.f32 %v40, %v463
    %465 = vmatpush1.msra.mxu0 %v464
    %v466 = vand.u32 %v43, 4294901760
    %v467 = vsub.f32 %v43, %v466
    %468 = vmatprep.subr.mxu0 %v467
    %v469 = vand.u32 %v42, 4294901760
    %v470 = vsub.f32 %v42, %v469
    %471 = vmatpush1.msra.mxu0 %v470
    %v472 = vand.u32 %v45, 4294901760
    %v473 = vsub.f32 %v45, %v472
    %474 = vmatprep.subr.mxu0 %v473
    %v475 = vand.u32 %v44, 4294901760
    %v476 = vsub.f32 %v44, %v475
    %477 = vmatpush1.msra.mxu0 %v476
    %v478 = vand.u32 %v47, 4294901760
    %v479 = vsub.f32 %v47, %v478
    %480 = vmatprep.subr.mxu0 %v479
    %v481 = vand.u32 %v46, 4294901760
    %v482 = vsub.f32 %v46, %v481
    %483 = vmatpush1.msra.mxu0 %v482
    %v484 = vand.u32 %v49, 4294901760
    %v485 = vsub.f32 %v49, %v484
    %486 = vmatprep.subr.mxu0 %v485
    %v487 = vand.u32 %v48, 4294901760
    %v488 = vsub.f32 %v48, %v487
    %489 = vmatpush1.msra.mxu0 %v488
    %v490 = vand.u32 %v51, 4294901760
    %v491 = vsub.f32 %v51, %v490
    %492 = vmatprep.subr.mxu0 %v491
    %v493 = vand.u32 %v50, 4294901760
    %v494 = vsub.f32 %v50, %v493
    %495 = vmatpush1.msra.mxu0 %v494
    %v496 = vand.u32 %v53, 4294901760
    %v497 = vsub.f32 %v53, %v496
    %498 = vmatprep.subr.mxu0 %v497
    %v499 = vand.u32 %v52, 4294901760
    %v500 = vsub.f32 %v52, %v499
    %501 = vmatpush1.msra.mxu0 %v500
    %502 = vmatprep.subr.mxu0 0.0
    %503 = vmatpush1.msra.mxu0 0.0
    %504 = vmatprep.subr.mxu0 0.0
    %505 = vmatpush1.msra.mxu0 0.0
    %506 = vmatprep.subr.mxu0 0.0
    %507 = vmatpush1.msra.mxu0 0.0
    %508 = vmatprep.subr.mxu0 0.0
    %509 = vmatpush1.msra.mxu0 0.0
    %510 = vmatprep.subr.mxu0 0.0
    %511 = vmatpush1.msra.mxu0 0.0
    %512 = vmatprep.subr.mxu0 0.0
    %513 = vmatpush1.msra.mxu0 0.0
    %514 = vmatprep.subr.mxu0 0.0
    %515 = vmatpush1.msra.mxu0 0.0
    %516 = vmatprep.subr.mxu0 0.0
    %517 = vmatpush1.msra.mxu0 0.0
    %518 = vmatprep.subr.mxu0 0.0
    %519 = vmatpush1.msra.mxu0 0.0
    %520 = vmatprep.subr.mxu0 0.0
    %521 = vmatpush1.msra.mxu0 0.0
    %522 = vmatprep.subr.mxu0 0.0
    %523 = vmatpush1.msra.mxu0 0.0
    %524 = vmatprep.subr.mxu0 0.0
    %525 = vmatpush1.msra.mxu0 0.0
    %526 = vmatprep.subr.mxu0 0.0
    %527 = vmatpush1.msra.mxu0 0.0
    %528 = vmatprep.subr.mxu0 0.0
    %529 = vmatpush1.msra.mxu0 0.0
    %530 = vmatprep.subr.mxu0 0.0
    %531 = vmatpush1.msra.mxu0 0.0
    %532 = vmatprep.subr.mxu0 0.0
    %533 = vmatpush1.msra.mxu0 0.0
    %534 = vmatprep.mubr.f32.mxu0 0.0
    %v535 = vand.u32 %v21, 4294901760
    %v536 = vsub.f32 %v21, %v535
    %537 = vmatmul.mubr.f32.gmra.mrb[0].mxu0 %v536
    %v538 = vpop.f32.mrb[0].mxu0
    %v539 = vadd.f32 %v402, %v538
    %v540 = vpop.f32.mrb[0].mxu0
    %v541 = vadd.f32 %v404, %v540
    %542 = vdwg.mxu0
    %v543 = vand.u32 %v23, 4294901760
    %544 = vmatprep.subr.mxu0 %v543
    %v545 = vand.u32 %v22, 4294901760
    %546 = vmatpush1.msra.mxu0 %v545
    %v547 = vand.u32 %v25, 4294901760
    %548 = vmatprep.subr.mxu0 %v547
    %v549 = vand.u32 %v24, 4294901760
    %550 = vmatpush1.msra.mxu0 %v549
    %v551 = vand.u32 %v27, 4294901760
    %552 = vmatprep.subr.mxu0 %v551
    %v553 = vand.u32 %v26, 4294901760
    %554 = vmatpush1.msra.mxu0 %v553
    %v555 = vand.u32 %v29, 4294901760
    %556 = vmatprep.subr.mxu0 %v555
    %v557 = vand.u32 %v28, 4294901760
    %558 = vmatpush1.msra.mxu0 %v557
    %v559 = vand.u32 %v31, 4294901760
    %560 = vmatprep.subr.mxu0 %v559
    %v561 = vand.u32 %v30, 4294901760
    %562 = vmatpush1.msra.mxu0 %v561
    %v563 = vand.u32 %v33, 4294901760
    %564 = vmatprep.subr.mxu0 %v563
    %v565 = vand.u32 %v32, 4294901760
    %566 = vmatpush1.msra.mxu0 %v565
    %v567 = vand.u32 %v35, 4294901760
    %568 = vmatprep.subr.mxu0 %v567
    %v569 = vand.u32 %v34, 4294901760
    %570 = vmatpush1.msra.mxu0 %v569
    %v571 = vand.u32 %v37, 4294901760
    %572 = vmatprep.subr.mxu0 %v571
    %v573 = vand.u32 %v36, 4294901760
    %574 = vmatpush1.msra.mxu0 %v573
    %v575 = vand.u32 %v39, 4294901760
    %576 = vmatprep.subr.mxu0 %v575
    %v577 = vand.u32 %v38, 4294901760
    %578 = vmatpush1.msra.mxu0 %v577
    %v579 = vand.u32 %v41, 4294901760
    %580 = vmatprep.subr.mxu0 %v579
    %v581 = vand.u32 %v40, 4294901760
    %582 = vmatpush1.msra.mxu0 %v581
    %v583 = vand.u32 %v43, 4294901760
    %584 = vmatprep.subr.mxu0 %v583
    %v585 = vand.u32 %v42, 4294901760
    %586 = vmatpush1.msra.mxu0 %v585
    %v587 = vand.u32 %v45, 4294901760
    %588 = vmatprep.subr.mxu0 %v587
    %v589 = vand.u32 %v44, 4294901760
    %590 = vmatpush1.msra.mxu0 %v589
    %v591 = vand.u32 %v47, 4294901760
    %592 = vmatprep.subr.mxu0 %v591
    %v593 = vand.u32 %v46, 4294901760
    %594 = vmatpush1.msra.mxu0 %v593
    %v595 = vand.u32 %v49, 4294901760
    %596 = vmatprep.subr.mxu0 %v595
    %v597 = vand.u32 %v48, 4294901760
    %598 = vmatpush1.msra.mxu0 %v597
    %v599 = vand.u32 %v51, 4294901760
    %600 = vmatprep.subr.mxu0 %v599
    %v601 = vand.u32 %v50, 4294901760
    %602 = vmatpush1.msra.mxu0 %v601
    %v603 = vand.u32 %v53, 4294901760
    %604 = vmatprep.subr.mxu0 %v603
    %v605 = vand.u32 %v52, 4294901760
    %606 = vmatpush1.msra.mxu0 %v605
    %607 = vmatprep.subr.mxu0 0.0
    %608 = vmatpush1.msra.mxu0 0.0
    %609 = vmatprep.subr.mxu0 0.0
    %610 = vmatpush1.msra.mxu0 0.0
    %611 = vmatprep.subr.mxu0 0.0
    %612 = vmatpush1.msra.mxu0 0.0
    %613 = vmatprep.subr.mxu0 0.0
    %614 = vmatpush1.msra.mxu0 0.0
    %615 = vmatprep.subr.mxu0 0.0
    %616 = vmatpush1.msra.mxu0 0.0
    %617 = vmatprep.subr.mxu0 0.0
    %618 = vmatpush1.msra.mxu0 0.0
    %619 = vmatprep.subr.mxu0 0.0
    %620 = vmatpush1.msra.mxu0 0.0
    %621 = vmatprep.subr.mxu0 0.0
    %622 = vmatpush1.msra.mxu0 0.0
    %623 = vmatprep.subr.mxu0 0.0
    %624 = vmatpush1.msra.mxu0 0.0
    %625 = vmatprep.subr.mxu0 0.0
    %626 = vmatpush1.msra.mxu0 0.0
    %627 = vmatprep.subr.mxu0 0.0
    %628 = vmatpush1.msra.mxu0 0.0
    %629 = vmatprep.subr.mxu0 0.0
    %630 = vmatpush1.msra.mxu0 0.0
    %631 = vmatprep.subr.mxu0 0.0
    %632 = vmatpush1.msra.mxu0 0.0
    %633 = vmatprep.subr.mxu0 0.0
    %634 = vmatpush1.msra.mxu0 0.0
    %635 = vmatprep.subr.mxu0 0.0
    %636 = vmatpush1.msra.mxu0 0.0
    %637 = vmatprep.subr.mxu0 0.0
    %638 = vmatpush1.msra.mxu0 0.0
    %639 = vmatprep.mubr.f32.mxu0 0.0
    %v640 = vand.u32 %v21, 4294901760
    %v641 = vsub.f32 %v21, %v640
    %v642 = vand.u32 %v641, 4294901760
    %643 = vmatmul.mubr.f32.gmra.mrb[0].mxu0 %v642
    %v644 = vpop.f32.mrb[0].mxu0
    %v645 = vadd.f32 %v539, %v644
    %v646 = vpop.f32.mrb[0].mxu0
    %v647 = vadd.f32 %v541, %v646
    %648 = vdwg.mxu0
    %v649 = vand.u32 %v23, 4294901760
    %v650 = vsub.f32 %v23, %v649
    %v651 = vand.u32 %v650, 4294901760
    %652 = vmatprep.subr.mxu0 %v651
    %v653 = vand.u32 %v22, 4294901760
    %v654 = vsub.f32 %v22, %v653
    %v655 = vand.u32 %v654, 4294901760
    %656 = vmatpush1.msra.mxu0 %v655
    %v657 = vand.u32 %v25, 4294901760
    %v658 = vsub.f32 %v25, %v657
    %v659 = vand.u32 %v658, 4294901760
    %660 = vmatprep.subr.mxu0 %v659
    %v661 = vand.u32 %v24, 4294901760
    %v662 = vsub.f32 %v24, %v661
    %v663 = vand.u32 %v662, 4294901760
    %664 = vmatpush1.msra.mxu0 %v663
    %v665 = vand.u32 %v27, 4294901760
    %v666 = vsub.f32 %v27, %v665
    %v667 = vand.u32 %v666, 4294901760
    %668 = vmatprep.subr.mxu0 %v667
    %v669 = vand.u32 %v26, 4294901760
    %v670 = vsub.f32 %v26, %v669
    %v671 = vand.u32 %v670, 4294901760
    %672 = vmatpush1.msra.mxu0 %v671
    %v673 = vand.u32 %v29, 4294901760
    %v674 = vsub.f32 %v29, %v673
    %v675 = vand.u32 %v674, 4294901760
    %676 = vmatprep.subr.mxu0 %v675
    %v677 = vand.u32 %v28, 4294901760
    %v678 = vsub.f32 %v28, %v677
    %v679 = vand.u32 %v678, 4294901760
    %680 = vmatpush1.msra.mxu0 %v679
    %v681 = vand.u32 %v31, 4294901760
    %v682 = vsub.f32 %v31, %v681
    %v683 = vand.u32 %v682, 4294901760
    %684 = vmatprep.subr.mxu0 %v683
    %v685 = vand.u32 %v30, 4294901760
    %v686 = vsub.f32 %v30, %v685
    %v687 = vand.u32 %v686, 4294901760
    %688 = vmatpush1.msra.mxu0 %v687
    %v689 = vand.u32 %v33, 4294901760
    %v690 = vsub.f32 %v33, %v689
    %v691 = vand.u32 %v690, 4294901760
    %692 = vmatprep.subr.mxu0 %v691
    %v693 = vand.u32 %v32, 4294901760
    %v694 = vsub.f32 %v32, %v693
    %v695 = vand.u32 %v694, 4294901760
    %696 = vmatpush1.msra.mxu0 %v695
    %v697 = vand.u32 %v35, 4294901760
    %v698 = vsub.f32 %v35, %v697
    %v699 = vand.u32 %v698, 4294901760
    %700 = vmatprep.subr.mxu0 %v699
    %v701 = vand.u32 %v34, 4294901760
    %v702 = vsub.f32 %v34, %v701
    %v703 = vand.u32 %v702, 4294901760
    %704 = vmatpush1.msra.mxu0 %v703
    %v705 = vand.u32 %v37, 4294901760
    %v706 = vsub.f32 %v37, %v705
    %v707 = vand.u32 %v706, 4294901760
    %708 = vmatprep.subr.mxu0 %v707
    %v709 = vand.u32 %v36, 4294901760
    %v710 = vsub.f32 %v36, %v709
    %v711 = vand.u32 %v710, 4294901760
    %712 = vmatpush1.msra.mxu0 %v711
    %v713 = vand.u32 %v39, 4294901760
    %v714 = vsub.f32 %v39, %v713
    %v715 = vand.u32 %v714, 4294901760
    %716 = vmatprep.subr.mxu0 %v715
    %v717 = vand.u32 %v38, 4294901760
    %v718 = vsub.f32 %v38, %v717
    %v719 = vand.u32 %v718, 4294901760
    %720 = vmatpush1.msra.mxu0 %v719
    %v721 = vand.u32 %v41, 4294901760
    %v722 = vsub.f32 %v41, %v721
    %v723 = vand.u32 %v722, 4294901760
    %724 = vmatprep.subr.mxu0 %v723
    %v725 = vand.u32 %v40, 4294901760
    %v726 = vsub.f32 %v40, %v725
    %v727 = vand.u32 %v726, 4294901760
    %728 = vmatpush1.msra.mxu0 %v727
    %v729 = vand.u32 %v43, 4294901760
    %v730 = vsub.f32 %v43, %v729
    %v731 = vand.u32 %v730, 4294901760
    %732 = vmatprep.subr.mxu0 %v731
    %v733 = vand.u32 %v42, 4294901760
    %v734 = vsub.f32 %v42, %v733
    %v735 = vand.u32 %v734, 4294901760
    %736 = vmatpush1.msra.mxu0 %v735
    %v737 = vand.u32 %v45, 4294901760
    %v738 = vsub.f32 %v45, %v737
    %v739 = vand.u32 %v738, 4294901760
    %740 = vmatprep.subr.mxu0 %v739
    %v741 = vand.u32 %v44, 4294901760
    %v742 = vsub.f32 %v44, %v741
    %v743 = vand.u32 %v742, 4294901760
    %744 = vmatpush1.msra.mxu0 %v743
    %v745 = vand.u32 %v47, 4294901760
    %v746 = vsub.f32 %v47, %v745
    %v747 = vand.u32 %v746, 4294901760
    %748 = vmatprep.subr.mxu0 %v747
    %v749 = vand.u32 %v46, 4294901760
    %v750 = vsub.f32 %v46, %v749
    %v751 = vand.u32 %v750, 4294901760
    %752 = vmatpush1.msra.mxu0 %v751
    %v753 = vand.u32 %v49, 4294901760
    %v754 = vsub.f32 %v49, %v753
    %v755 = vand.u32 %v754, 4294901760
    %756 = vmatprep.subr.mxu0 %v755
    %v757 = vand.u32 %v48, 4294901760
    %v758 = vsub.f32 %v48, %v757
    %v759 = vand.u32 %v758, 4294901760
    %760 = vmatpush1.msra.mxu0 %v759
    %v761 = vand.u32 %v51, 4294901760
    %v762 = vsub.f32 %v51, %v761
    %v763 = vand.u32 %v762, 4294901760
    %764 = vmatprep.subr.mxu0 %v763
    %v765 = vand.u32 %v50, 4294901760
    %v766 = vsub.f32 %v50, %v765
    %v767 = vand.u32 %v766, 4294901760
    %768 = vmatpush1.msra.mxu0 %v767
    %v769 = vand.u32 %v53, 4294901760
    %v770 = vsub.f32 %v53, %v769
    %v771 = vand.u32 %v770, 4294901760
    %772 = vmatprep.subr.mxu0 %v771
    %v773 = vand.u32 %v52, 4294901760
    %v774 = vsub.f32 %v52, %v773
    %v775 = vand.u32 %v774, 4294901760
    %776 = vmatpush1.msra.mxu0 %v775
    %777 = vmatprep.subr.mxu0 0.0
    %778 = vmatpush1.msra.mxu0 0.0
    %779 = vmatprep.subr.mxu0 0.0
    %780 = vmatpush1.msra.mxu0 0.0
    %781 = vmatprep.subr.mxu0 0.0
    %782 = vmatpush1.msra.mxu0 0.0
    %783 = vmatprep.subr.mxu0 0.0
    %784 = vmatpush1.msra.mxu0 0.0
    %785 = vmatprep.subr.mxu0 0.0
    %786 = vmatpush1.msra.mxu0 0.0
    %787 = vmatprep.subr.mxu0 0.0
    %788 = vmatpush1.msra.mxu0 0.0
    %789 = vmatprep.subr.mxu0 0.0
    %790 = vmatpush1.msra.mxu0 0.0
    %791 = vmatprep.subr.mxu0 0.0
    %792 = vmatpush1.msra.mxu0 0.0
    %793 = vmatprep.subr.mxu0 0.0
    %794 = vmatpush1.msra.mxu0 0.0
    %795 = vmatprep.subr.mxu0 0.0
    %796 = vmatpush1.msra.mxu0 0.0
    %797 = vmatprep.subr.mxu0 0.0
    %798 = vmatpush1.msra.mxu0 0.0
    %799 = vmatprep.subr.mxu0 0.0
    %800 = vmatpush1.msra.mxu0 0.0
    %801 = vmatprep.subr.mxu0 0.0
    %802 = vmatpush1.msra.mxu0 0.0
    %803 = vmatprep.subr.mxu0 0.0
    %804 = vmatpush1.msra.mxu0 0.0
    %805 = vmatprep.subr.mxu0 0.0
    %806 = vmatpush1.msra.mxu0 0.0
    %807 = vmatprep.subr.mxu0 0.0
    %808 = vmatpush1.msra.mxu0 0.0
    %809 = vmatprep.mubr.f32.mxu0 0.0
    %v810 = vand.u32 %v21, 4294901760
    %811 = vmatmul.mubr.f32.gmra.mrb[0].mxu0 %v810
    %v812 = vpop.f32.mrb[0].mxu0
    %v813 = vadd.f32 %v645, %v812
    %v814 = vpop.f32.mrb[0].mxu0
    %v815 = vadd.f32 %v647, %v814
    %816 = vdwg.mxu0
    %v817 = vand.u32 %v23, 4294901760
    %818 = vmatprep.subr.mxu0 %v817
    %v819 = vand.u32 %v22, 4294901760
    %820 = vmatpush1.msra.mxu0 %v819
    %v821 = vand.u32 %v25, 4294901760
    %822 = vmatprep.subr.mxu0 %v821
    %v823 = vand.u32 %v24, 4294901760
    %824 = vmatpush1.msra.mxu0 %v823
    %v825 = vand.u32 %v27, 4294901760
    %826 = vmatprep.subr.mxu0 %v825
    %v827 = vand.u32 %v26, 4294901760
    %828 = vmatpush1.msra.mxu0 %v827
    %v829 = vand.u32 %v29, 4294901760
    %830 = vmatprep.subr.mxu0 %v829
    %v831 = vand.u32 %v28, 4294901760
    %832 = vmatpush1.msra.mxu0 %v831
    %v833 = vand.u32 %v31, 4294901760
    %834 = vmatprep.subr.mxu0 %v833
    %v835 = vand.u32 %v30, 4294901760
    %836 = vmatpush1.msra.mxu0 %v835
    %v837 = vand.u32 %v33, 4294901760
    %838 = vmatprep.subr.mxu0 %v837
    %v839 = vand.u32 %v32, 4294901760
    %840 = vmatpush1.msra.mxu0 %v839
    %v841 = vand.u32 %v35, 4294901760
    %842 = vmatprep.subr.mxu0 %v841
    %v843 = vand.u32 %v34, 4294901760
    %844 = vmatpush1.msra.mxu0 %v843
    %v845 = vand.u32 %v37, 4294901760
    %846 = vmatprep.subr.mxu0 %v845
    %v847 = vand.u32 %v36, 4294901760
    %848 = vmatpush1.msra.mxu0 %v847
    %v849 = vand.u32 %v39, 4294901760
    %850 = vmatprep.subr.mxu0 %v849
    %v851 = vand.u32 %v38, 4294901760
    %852 = vmatpush1.msra.mxu0 %v851
    %v853 = vand.u32 %v41, 4294901760
    %854 = vmatprep.subr.mxu0 %v853
    %v855 = vand.u32 %v40, 4294901760
    %856 = vmatpush1.msra.mxu0 %v855
    %v857 = vand.u32 %v43, 4294901760
    %858 = vmatprep.subr.mxu0 %v857
    %v859 = vand.u32 %v42, 4294901760
    %860 = vmatpush1.msra.mxu0 %v859
    %v861 = vand.u32 %v45, 4294901760
    %862 = vmatprep.subr.mxu0 %v861
    %v863 = vand.u32 %v44, 4294901760
    %864 = vmatpush1.msra.mxu0 %v863
    %v865 = vand.u32 %v47, 4294901760
    %866 = vmatprep.subr.mxu0 %v865
    %v867 = vand.u32 %v46, 4294901760
    %868 = vmatpush1.msra.mxu0 %v867
    %v869 = vand.u32 %v49, 4294901760
    %870 = vmatprep.subr.mxu0 %v869
    %v871 = vand.u32 %v48, 4294901760
    %872 = vmatpush1.msra.mxu0 %v871
    %v873 = vand.u32 %v51, 4294901760
    %874 = vmatprep.subr.mxu0 %v873
    %v875 = vand.u32 %v50, 4294901760
    %876 = vmatpush1.msra.mxu0 %v875
    %v877 = vand.u32 %v53, 4294901760
    %878 = vmatprep.subr.mxu0 %v877
    %v879 = vand.u32 %v52, 4294901760
    %880 = vmatpush1.msra.mxu0 %v879
    %881 = vmatprep.subr.mxu0 0.0
    %882 = vmatpush1.msra.mxu0 0.0
    %883 = vmatprep.subr.mxu0 0.0
    %884 = vmatpush1.msra.mxu0 0.0
    %885 = vmatprep.subr.mxu0 0.0
    %886 = vmatpush1.msra.mxu0 0.0
    %887 = vmatprep.subr.mxu0 0.0
    %888 = vmatpush1.msra.mxu0 0.0
    %889 = vmatprep.subr.mxu0 0.0
    %890 = vmatpush1.msra.mxu0 0.0
    %891 = vmatprep.subr.mxu0 0.0
    %892 = vmatpush1.msra.mxu0 0.0
    %893 = vmatprep.subr.mxu0 0.0
    %894 = vmatpush1.msra.mxu0 0.0
    %895 = vmatprep.subr.mxu0 0.0
    %896 = vmatpush1.msra.mxu0 0.0
    %897 = vmatprep.subr.mxu0 0.0
    %898 = vmatpush1.msra.mxu0 0.0
    %899 = vmatprep.subr.mxu0 0.0
    %900 = vmatpush1.msra.mxu0 0.0
    %901 = vmatprep.subr.mxu0 0.0
    %902 = vmatpush1.msra.mxu0 0.0
    %903 = vmatprep.subr.mxu0 0.0
    %904 = vmatpush1.msra.mxu0 0.0
    %905 = vmatprep.subr.mxu0 0.0
    %906 = vmatpush1.msra.mxu0 0.0
    %907 = vmatprep.subr.mxu0 0.0
    %908 = vmatpush1.msra.mxu0 0.0
    %909 = vmatprep.subr.mxu0 0.0
    %910 = vmatpush1.msra.mxu0 0.0
    %911 = vmatprep.subr.mxu0 0.0
    %912 = vmatpush1.msra.mxu0 0.0
    %913 = vmatprep.mubr.f32.mxu0 0.0
    %v914 = vand.u32 %v21, 4294901760
    %915 = vmatmul.mubr.f32.gmra.mrb[0].mxu0 %v914
    %v916 = vpop.f32.mrb[0].mxu0
    %v917 = vadd.f32 %v813, %v916
    %v918 = vpop.f32.mrb[0].mxu0
    %v919 = vadd.f32 %v815, %v918
    %920 = vdwg.mxu0
    %v921 = vmax.f32 %v917, 0.0
    %v922 = vmax.f32 %v919, 0.0
    %v923 = vld [vmem:[%s3] sm:$0xff]
    %v924 = vld [vmem:[%s3 + $0x8] sm:$0xff]
    %v925 = vld [vmem:[%s3 + $0x10] sm:$0xff]
    %v926 = vld [vmem:[%s3 + $0x18] sm:$0xff]
    %v927 = vld [vmem:[%s3 + $0x20] sm:$0xff]
    %v928 = vld [vmem:[%s3 + $0x28] sm:$0xff]
    %v929 = vld [vmem:[%s3 + $0x30] sm:$0xff]
    %v930 = vld [vmem:[%s3 + $0x38] sm:$0xff]
    %v931 = vld [vmem:[%s3 + $0x40] sm:$0xff]
    %v932 = vld [vmem:[%s3 + $0x48] sm:$0xff]
    %v933 = vld [vmem:[%s3 + $0x50] sm:$0xff]
    %v934 = vld [vmem:[%s3 + $0x58] sm:$0xff]
    %v935 = vld [vmem:[%s3 + $0x60] sm:$0xff]
    %v936 = vld [vmem:[%s3 + $0x68] sm:$0xff]
    %v937 = vld [vmem:[%s3 + $0x70] sm:$0xff]
    %v938 = vld [vmem:[%s3 + $0x78] sm:$0xff]
    %v939 = vld [vmem:[%s3 + $0x80] sm:$0xff]
    %v940 = vld [vmem:[%s3 + $0x88] sm:$0xff]
    %v941 = vld [vmem:[%s3 + $0x90] sm:$0xff]
    %v942 = vld [vmem:[%s3 + $0x98] sm:$0xff]
    %v943 = vld [vmem:[%s3 + $0xa0] sm:$0xff]
    %v944 = vld [vmem:[%s3 + $0xa8] sm:$0xff]
    %v945 = vld [vmem:[%s3 + $0xb0] sm:$0xff]
    %v946 = vld [vmem:[%s3 + $0xb8] sm:$0xff]
    %v947 = vld [vmem:[%s3 + $0xc0] sm:$0xff]
    %v948 = vld [vmem:[%s3 + $0xc8] sm:$0xff]
    %v949 = vld [vmem:[%s3 + $0xd0] sm:$0xff]
    %v950 = vld [vmem:[%s3 + $0xd8] sm:$0xff]
    %v951 = vld [vmem:[%s3 + $0xe0] sm:$0xff]
    %v952 = vld [vmem:[%s3 + $0xe8] sm:$0xff]
    %v953 = vld [vmem:[%s3 + $0xf0] sm:$0xff]
    %v954 = vld [vmem:[%s3 + $0xf8] sm:$0xff]
    %v955 = vld [vmem:[%s4] sm:$0x1]
    %956 = vmatprep.subr.mxu0 0.0
    %v957 = vand.u32 %v923, 4294901760
    %958 = vmatpush1.msra.mxu0 %v957
    %959 = vmatprep.subr.mxu0 0.0
    %v960 = vand.u32 %v924, 4294901760
    %961 = vmatpush1.msra.mxu0 %v960
    %962 = vmatprep.subr.mxu0 0.0
    %v963 = vand.u32 %v925, 4294901760
    %964 = vmatpush1.msra.mxu0 %v963
    %965 = vmatprep.subr.mxu0 0.0
    %v966 = vand.u32 %v926, 4294901760
    %967 = vmatpush1.msra.mxu0 %v966
    %968 = vmatprep.subr.mxu0 0.0
    %v969 = vand.u32 %v927, 4294901760
    %970 = vmatpush1.msra.mxu0 %v969
    %971 = vmatprep.subr.mxu0 0.0
    %v972 = vand.u32 %v928, 4294901760
    %973 = vmatpush1.msra.mxu0 %v972
    %974 = vmatprep.subr.mxu0 0.0
    %v975 = vand.u32 %v929, 4294901760
    %976 = vmatpush1.msra.mxu0 %v975
    %977 = vmatprep.subr.mxu0 0.0
    %v978 = vand.u32 %v930, 4294901760
    %979 = vmatpush1.msra.mxu0 %v978
    %980 = vmatprep.subr.mxu0 0.0
    %v981 = vand.u32 %v931, 4294901760
    %982 = vmatpush1.msra.mxu0 %v981
    %983 = vmatprep.subr.mxu0 0.0
    %v984 = vand.u32 %v932, 4294901760
    %985 = vmatpush1.msra.mxu0 %v984
    %986 = vmatprep.subr.mxu0 0.0
    %v987 = vand.u32 %v933, 4294901760
    %988 = vmatpush1.msra.mxu0 %v987
    %989 = vmatprep.subr.mxu0 0.0
    %v990 = vand.u32 %v934, 4294901760
    %991 = vmatpush1.msra.mxu0 %v990
    %992 = vmatprep.subr.mxu0 0.0
    %v993 = vand.u32 %v935, 4294901760
    %994 = vmatpush1.msra.mxu0 %v993
    %995 = vmatprep.subr.mxu0 0.0
    %v996 = vand.u32 %v936, 4294901760
    %997 = vmatpush1.msra.mxu0 %v996
    %998 = vmatprep.subr.mxu0 0.0
    %v999 = vand.u32 %v937, 4294901760
    %1000 = vmatpush1.msra.mxu0 %v999
    %1001 = vmatprep.subr.mxu0 0.0
    %v1002 = vand.u32 %v938, 4294901760
    %1003 = vmatpush1.msra.mxu0 %v1002
    %1004 = vmatprep.subr.mxu0 0.0
    %v1005 = vand.u32 %v939, 4294901760
    %1006 = vmatpush1.msra.mxu0 %v1005
    %1007 = vmatprep.subr.mxu0 0.0
    %v1008 = vand.u32 %v940, 4294901760
    %1009 = vmatpush1.msra.mxu0 %v1008
    %1010 = vmatprep.subr.mxu0 0.0
    %v1011 = vand.u32 %v941, 4294901760
    %1012 = vmatpush1.msra.mxu0 %v1011
    %1013 = vmatprep.subr.mxu0 0.0
    %v1014 = vand.u32 %v942, 4294901760
    %1015 = vmatpush1.msra.mxu0 %v1014
    %1016 = vmatprep.subr.mxu0 0.0
    %v1017 = vand.u32 %v943, 4294901760
    %1018 = vmatpush1.msra.mxu0 %v1017
    %1019 = vmatprep.subr.mxu0 0.0
    %v1020 = vand.u32 %v944, 4294901760
    %1021 = vmatpush1.msra.mxu0 %v1020
    %1022 = vmatprep.subr.mxu0 0.0
    %v1023 = vand.u32 %v945, 4294901760
    %1024 = vmatpush1.msra.mxu0 %v1023
    %1025 = vmatprep.subr.mxu0 0.0
    %v1026 = vand.u32 %v946, 4294901760
    %1027 = vmatpush1.msra.mxu0 %v1026
    %1028 = vmatprep.subr.mxu0 0.0
    %v1029 = vand.u32 %v947, 4294901760
    %1030 = vmatpush1.msra.mxu0 %v1029
    %1031 = vmatprep.subr.mxu0 0.0
    %v1032 = vand.u32 %v948, 4294901760
    %1033 = vmatpush1.msra.mxu0 %v1032
    %1034 = vmatprep.subr.mxu0 0.0
    %v1035 = vand.u32 %v949, 4294901760
    %1036 = vmatpush1.msra.mxu0 %v1035
    %1037 = vmatprep.subr.mxu0 0.0
    %v1038 = vand.u32 %v950, 4294901760
    %1039 = vmatpush1.msra.mxu0 %v1038
    %1040 = vmatprep.subr.mxu0 0.0
    %v1041 = vand.u32 %v951, 4294901760
    %1042 = vmatpush1.msra.mxu0 %v1041
    %1043 = vmatprep.subr.mxu0 0.0
    %v1044 = vand.u32 %v952, 4294901760
    %1045 = vmatpush1.msra.mxu0 %v1044
    %1046 = vmatprep.subr.mxu0 0.0
    %v1047 = vand.u32 %v953, 4294901760
    %1048 = vmatpush1.msra.mxu0 %v1047
    %1049 = vmatprep.subr.mxu0 0.0
    %v1050 = vand.u32 %v954, 4294901760
    %1051 = vmatpush1.msra.mxu0 %v1050
    %v1052 = vand.u32 %v922, 4294901760
    %v1053 = vsub.f32 %v922, %v1052
    %v1054 = vand.u32 %v1053, 4294901760
    %v1055 = vsub.f32 %v1053, %v1054
    %v1056 = vand.u32 %v1055, 4294901760
    %1057 = vmatprep.mubr.f32.mxu0 %v1056
    %v1058 = vand.u32 %v921, 4294901760
    %v1059 = vsub.f32 %v921, %v1058
    %v1060 = vand.u32 %v1059, 4294901760
    %v1061 = vsub.f32 %v1059, %v1060
    %v1062 = vand.u32 %v1061, 4294901760
    %1063 = vmatmul.mubr.f32.gmra.mrb[0].mxu0 %v1062
    %v1064 = vpop.f32.mrb[0].mxu0
    %v1065 = vadd.f32 %v955, %v1064
    %v1066 = vpop.f32.mrb[0].mxu0
    %1067 = vdwg.mxu0
    %1068 = vmatprep.subr.mxu0 0.0
    %v1069 = vand.u32 %v923, 4294901760
    %v1070 = vsub.f32 %v923, %v1069
    %v1071 = vand.u32 %v1070, 4294901760
    %v1072 = vsub.f32 %v1070, %v1071
    %v1073 = vand.u32 %v1072, 4294901760
    %1074 = vmatpush1.msra.mxu0 %v1073
    %1075 = vmatprep.subr.mxu0 0.0
    %v1076 = vand.u32 %v924, 4294901760
    %v1077 = vsub.f32 %v924, %v1076
    %v1078 = vand.u32 %v1077, 4294901760
    %v1079 = vsub.f32 %v1077, %v1078
    %v1080 = vand.u32 %v1079, 4294901760
    %1081 = vmatpush1.msra.mxu0 %v1080
    %1082 = vmatprep.subr.mxu0 0.0
    %v1083 = vand.u32 %v925, 4294901760
    %v1084 = vsub.f32 %v925, %v1083
    %v1085 = vand.u32 %v1084, 4294901760
    %v1086 = vsub.f32 %v1084, %v1085
    %v1087 = vand.u32 %v1086, 4294901760
    %1088 = vmatpush1.msra.mxu0 %v1087
    %1089 = vmatprep.subr.mxu0 0.0
    %v1090 = vand.u32 %v926, 4294901760
    %v1091 = vsub.f32 %v926, %v1090
    %v1092 = vand.u32 %v1091, 4294901760
    %v1093 = vsub.f32 %v1091, %v1092
    %v1094 = vand.u32 %v1093, 4294901760
    %1095 = vmatpush1.msra.mxu0 %v1094
    %1096 = vmatprep.subr.mxu0 0.0
    %v1097 = vand.u32 %v927, 4294901760
    %v1098 = vsub.f32 %v927, %v1097
    %v1099 = vand.u32 %v1098, 4294901760
    %v1100 = vsub.f32 %v1098, %v1099
    %v1101 = vand.u32 %v1100, 4294901760
    %1102 = vmatpush1.msra.mxu0 %v1101
    %1103 = vmatprep.subr.mxu0 0.0
    %v1104 = vand.u32 %v928, 4294901760
    %v1105 = vsub.f32 %v928, %v1104
    %v1106 = vand.u32 %v1105, 4294901760
    %v1107 = vsub.f32 %v1105, %v1106
    %v1108 = vand.u32 %v1107, 4294901760
    %1109 = vmatpush1.msra.mxu0 %v1108
    %1110 = vmatprep.subr.mxu0 0.0
    %v1111 = vand.u32 %v929, 4294901760
    %v1112 = vsub.f32 %v929, %v1111
    %v1113 = vand.u32 %v1112, 4294901760
    %v1114 = vsub.f32 %v1112, %v1113
    %v1115 = vand.u32 %v1114, 4294901760
    %1116 = vmatpush1.msra.mxu0 %v1115
    %1117 = vmatprep.subr.mxu0 0.0
    %v1118 = vand.u32 %v930, 4294901760
    %v1119 = vsub.f32 %v930, %v1118
    %v1120 = vand.u32 %v1119, 4294901760
    %v1121 = vsub.f32 %v1119, %v1120
    %v1122 = vand.u32 %v1121, 4294901760
    %1123 = vmatpush1.msra.mxu0 %v1122
    %1124 = vmatprep.subr.mxu0 0.0
    %v1125 = vand.u32 %v931, 4294901760
    %v1126 = vsub.f32 %v931, %v1125
    %v1127 = vand.u32 %v1126, 4294901760
    %v1128 = vsub.f32 %v1126, %v1127
    %v1129 = vand.u32 %v1128, 4294901760
    %1130 = vmatpush1.msra.mxu0 %v1129
    %1131 = vmatprep.subr.mxu0 0.0
    %v1132 = vand.u32 %v932, 4294901760
    %v1133 = vsub.f32 %v932, %v1132
    %v1134 = vand.u32 %v1133, 4294901760
    %v1135 = vsub.f32 %v1133, %v1134
    %v1136 = vand.u32 %v1135, 4294901760
    %1137 = vmatpush1.msra.mxu0 %v1136
    %1138 = vmatprep.subr.mxu0 0.0
    %v1139 = vand.u32 %v933, 4294901760
    %v1140 = vsub.f32 %v933, %v1139
    %v1141 = vand.u32 %v1140, 4294901760
    %v1142 = vsub.f32 %v1140, %v1141
    %v1143 = vand.u32 %v1142, 4294901760
    %1144 = vmatpush1.msra.mxu0 %v1143
    %1145 = vmatprep.subr.mxu0 0.0
    %v1146 = vand.u32 %v934, 4294901760
    %v1147 = vsub.f32 %v934, %v1146
    %v1148 = vand.u32 %v1147, 4294901760
    %v1149 = vsub.f32 %v1147, %v1148
    %v1150 = vand.u32 %v1149, 4294901760
    %1151 = vmatpush1.msra.mxu0 %v1150
    %1152 = vmatprep.subr.mxu0 0.0
    %v1153 = vand.u32 %v935, 4294901760
    %v1154 = vsub.f32 %v935, %v1153
    %v1155 = vand.u32 %v1154, 4294901760
    %v1156 = vsub.f32 %v1154, %v1155
    %v1157 = vand.u32 %v1156, 4294901760
    %1158 = vmatpush1.msra.mxu0 %v1157
    %1159 = vmatprep.subr.mxu0 0.0
    %v1160 = vand.u32 %v936, 4294901760
    %v1161 = vsub.f32 %v936, %v1160
    %v1162 = vand.u32 %v1161, 4294901760
    %v1163 = vsub.f32 %v1161, %v1162
    %v1164 = vand.u32 %v1163, 4294901760
    %1165 = vmatpush1.msra.mxu0 %v1164
    %1166 = vmatprep.subr.mxu0 0.0
    %v1167 = vand.u32 %v937, 4294901760
    %v1168 = vsub.f32 %v937, %v1167
    %v1169 = vand.u32 %v1168, 4294901760
    %v1170 = vsub.f32 %v1168, %v1169
    %v1171 = vand.u32 %v1170, 4294901760
    %1172 = vmatpush1.msra.mxu0 %v1171
    %1173 = vmatprep.subr.mxu0 0.0
    %v1174 = vand.u32 %v938, 4294901760
    %v1175 = vsub.f32 %v938, %v1174
    %v1176 = vand.u32 %v1175, 4294901760
    %v1177 = vsub.f32 %v1175, %v1176
    %v1178 = vand.u32 %v1177, 4294901760
    %1179 = vmatpush1.msra.mxu0 %v1178
    %1180 = vmatprep.subr.mxu0 0.0
    %v1181 = vand.u32 %v939, 4294901760
    %v1182 = vsub.f32 %v939, %v1181
    %v1183 = vand.u32 %v1182, 4294901760
    %v1184 = vsub.f32 %v1182, %v1183
    %v1185 = vand.u32 %v1184, 4294901760
    %1186 = vmatpush1.msra.mxu0 %v1185
    %1187 = vmatprep.subr.mxu0 0.0
    %v1188 = vand.u32 %v940, 4294901760
    %v1189 = vsub.f32 %v940, %v1188
    %v1190 = vand.u32 %v1189, 4294901760
    %v1191 = vsub.f32 %v1189, %v1190
    %v1192 = vand.u32 %v1191, 4294901760
    %1193 = vmatpush1.msra.mxu0 %v1192
    %1194 = vmatprep.subr.mxu0 0.0
    %v1195 = vand.u32 %v941, 4294901760
    %v1196 = vsub.f32 %v941, %v1195
    %v1197 = vand.u32 %v1196, 4294901760
    %v1198 = vsub.f32 %v1196, %v1197
    %v1199 = vand.u32 %v1198, 4294901760
    %1200 = vmatpush1.msra.mxu0 %v1199
    %1201 = vmatprep.subr.mxu0 0.0
    %v1202 = vand.u32 %v942, 4294901760
    %v1203 = vsub.f32 %v942, %v1202
    %v1204 = vand.u32 %v1203, 4294901760
    %v1205 = vsub.f32 %v1203, %v1204
    %v1206 = vand.u32 %v1205, 4294901760
    %1207 = vmatpush1.msra.mxu0 %v1206
    %1208 = vmatprep.subr.mxu0 0.0
    %v1209 = vand.u32 %v943, 4294901760
    %v1210 = vsub.f32 %v943, %v1209
    %v1211 = vand.u32 %v1210, 4294901760
    %v1212 = vsub.f32 %v1210, %v1211
    %v1213 = vand.u32 %v1212, 4294901760
    %1214 = vmatpush1.msra.mxu0 %v1213
    %1215 = vmatprep.subr.mxu0 0.0
    %v1216 = vand.u32 %v944, 4294901760
    %v1217 = vsub.f32 %v944, %v1216
    %v1218 = vand.u32 %v1217, 4294901760
    %v1219 = vsub.f32 %v1217, %v1218
    %v1220 = vand.u32 %v1219, 4294901760
    %1221 = vmatpush1.msra.mxu0 %v1220
    %1222 = vmatprep.subr.mxu0 0.0
    %v1223 = vand.u32 %v945, 4294901760
    %v1224 = vsub.f32 %v945, %v1223
    %v1225 = vand.u32 %v1224, 4294901760
    %v1226 = vsub.f32 %v1224, %v1225
    %v1227 = vand.u32 %v1226, 4294901760
    %1228 = vmatpush1.msra.mxu0 %v1227
    %1229 = vmatprep.subr.mxu0 0.0
    %v1230 = vand.u32 %v946, 4294901760
    %v1231 = vsub.f32 %v946, %v1230
    %v1232 = vand.u32 %v1231, 4294901760
    %v1233 = vsub.f32 %v1231, %v1232
    %v1234 = vand.u32 %v1233, 4294901760
    %1235 = vmatpush1.msra.mxu0 %v1234
    %1236 = vmatprep.subr.mxu0 0.0
    %v1237 = vand.u32 %v947, 4294901760
    %v1238 = vsub.f32 %v947, %v1237
    %v1239 = vand.u32 %v1238, 4294901760
    %v1240 = vsub.f32 %v1238, %v1239
    %v1241 = vand.u32 %v1240, 4294901760
    %1242 = vmatpush1.msra.mxu0 %v1241
    %1243 = vmatprep.subr.mxu0 0.0
    %v1244 = vand.u32 %v948, 4294901760
    %v1245 = vsub.f32 %v948, %v1244
    %v1246 = vand.u32 %v1245, 4294901760
    %v1247 = vsub.f32 %v1245, %v1246
    %v1248 = vand.u32 %v1247, 4294901760
    %1249 = vmatpush1.msra.mxu0 %v1248
    %1250 = vmatprep.subr.mxu0 0.0
    %v1251 = vand.u32 %v949, 4294901760
    %v1252 = vsub.f32 %v949, %v1251
    %v1253 = vand.u32 %v1252, 4294901760
    %v1254 = vsub.f32 %v1252, %v1253
    %v1255 = vand.u32 %v1254, 4294901760
    %1256 = vmatpush1.msra.mxu0 %v1255
    %1257 = vmatprep.subr.mxu0 0.0
    %v1258 = vand.u32 %v950, 4294901760
    %v1259 = vsub.f32 %v950, %v1258
    %v1260 = vand.u32 %v1259, 4294901760
    %v1261 = vsub.f32 %v1259, %v1260
    %v1262 = vand.u32 %v1261, 4294901760
    %1263 = vmatpush1.msra.mxu0 %v1262
    %1264 = vmatprep.subr.mxu0 0.0
    %v1265 = vand.u32 %v951, 4294901760
    %v1266 = vsub.f32 %v951, %v1265
    %v1267 = vand.u32 %v1266, 4294901760
    %v1268 = vsub.f32 %v1266, %v1267
    %v1269 = vand.u32 %v1268, 4294901760
    %1270 = vmatpush1.msra.mxu0 %v1269
    %1271 = vmatprep.subr.mxu0 0.0
    %v1272 = vand.u32 %v952, 4294901760
    %v1273 = vsub.f32 %v952, %v1272
    %v1274 = vand.u32 %v1273, 4294901760
    %v1275 = vsub.f32 %v1273, %v1274
    %v1276 = vand.u32 %v1275, 4294901760
    %1277 = vmatpush1.msra.mxu0 %v1276
    %1278 = vmatprep.subr.mxu0 0.0
    %v1279 = vand.u32 %v953, 4294901760
    %v1280 = vsub.f32 %v953, %v1279
    %v1281 = vand.u32 %v1280, 4294901760
    %v1282 = vsub.f32 %v1280, %v1281
    %v1283 = vand.u32 %v1282, 4294901760
    %1284 = vmatpush1.msra.mxu0 %v1283
    %1285 = vmatprep.subr.mxu0 0.0
    %v1286 = vand.u32 %v954, 4294901760
    %v1287 = vsub.f32 %v954, %v1286
    %v1288 = vand.u32 %v1287, 4294901760
    %v1289 = vsub.f32 %v1287, %v1288
    %v1290 = vand.u32 %v1289, 4294901760
    %1291 = vmatpush1.msra.mxu0 %v1290
    %v1292 = vand.u32 %v922, 4294901760
    %1293 = vmatprep.mubr.f32.mxu0 %v1292
    %v1294 = vand.u32 %v921, 4294901760
    %1295 = vmatmul.mubr.f32.gmra.mrb[0].mxu0 %v1294
    %v1296 = vpop.f32.mrb[0].mxu0
    %v1297 = vadd.f32 %v1065, %v1296
    %v1298 = vpop.f32.mrb[0].mxu0
    %1299 = vdwg.mxu0
    %1300 = vmatprep.subr.mxu0 0.0
    %v1301 = vand.u32 %v923, 4294901760
    %v1302 = vsub.f32 %v923, %v1301
    %1303 = vmatpush1.msra.mxu0 %v1302
    %1304 = vmatprep.subr.mxu0 0.0
    %v1305 = vand.u32 %v924, 4294901760
    %v1306 = vsub.f32 %v924, %v1305
    %1307 = vmatpush1.msra.mxu0 %v1306
    %1308 = vmatprep.subr.mxu0 0.0
    %v1309 = vand.u32 %v925, 4294901760
    %v1310 = vsub.f32 %v925, %v1309
    %1311 = vmatpush1.msra.mxu0 %v1310
    %1312 = vmatprep.subr.mxu0 0.0
    %v1313 = vand.u32 %v926, 4294901760
    %v1314 = vsub.f32 %v926, %v1313
    %1315 = vmatpush1.msra.mxu0 %v1314
    %1316 = vmatprep.subr.mxu0 0.0
    %v1317 = vand.u32 %v927, 4294901760
    %v1318 = vsub.f32 %v927, %v1317
    %1319 = vmatpush1.msra.mxu0 %v1318
    %1320 = vmatprep.subr.mxu0 0.0
    %v1321 = vand.u32 %v928, 4294901760
    %v1322 = vsub.f32 %v928, %v1321
    %1323 = vmatpush1.msra.mxu0 %v1322
    %1324 = vmatprep.subr.mxu0 0.0
    %v1325 = vand.u32 %v929, 4294901760
    %v1326 = vsub.f32 %v929, %v1325
    %1327 = vmatpush1.msra.mxu0 %v1326
    %1328 = vmatprep.subr.mxu0 0.0
    %v1329 = vand.u32 %v930, 4294901760
    %v1330 = vsub.f32 %v930, %v1329
    %1331 = vmatpush1.msra.mxu0 %v1330
    %1332 = vmatprep.subr.mxu0 0.0
    %v1333 = vand.u32 %v931, 4294901760
    %v1334 = vsub.f32 %v931, %v1333
    %1335 = vmatpush1.msra.mxu0 %v1334
    %1336 = vmatprep.subr.mxu0 0.0
    %v1337 = vand.u32 %v932, 4294901760
    %v1338 = vsub.f32 %v932, %v1337
    %1339 = vmatpush1.msra.mxu0 %v1338
    %1340 = vmatprep.subr.mxu0 0.0
    %v1341 = vand.u32 %v933, 4294901760
    %v1342 = vsub.f32 %v933, %v1341
    %1343 = vmatpush1.msra.mxu0 %v1342
    %1344 = vmatprep.subr.mxu0 0.0
    %v1345 = vand.u32 %v934, 4294901760
    %v1346 = vsub.f32 %v934, %v1345
    %1347 = vmatpush1.msra.mxu0 %v1346
    %1348 = vmatprep.subr.mxu0 0.0
    %v1349 = vand.u32 %v935, 4294901760
    %v1350 = vsub.f32 %v935, %v1349
    %1351 = vmatpush1.msra.mxu0 %v1350
    %1352 = vmatprep.subr.mxu0 0.0
    %v1353 = vand.u32 %v936, 4294901760
    %v1354 = vsub.f32 %v936, %v1353
    %1355 = vmatpush1.msra.mxu0 %v1354
    %1356 = vmatprep.subr.mxu0 0.0
    %v1357 = vand.u32 %v937, 4294901760
    %v1358 = vsub.f32 %v937, %v1357
    %1359 = vmatpush1.msra.mxu0 %v1358
    %1360 = vmatprep.subr.mxu0 0.0
    %v1361 = vand.u32 %v938, 4294901760
    %v1362 = vsub.f32 %v938, %v1361
    %1363 = vmatpush1.msra.mxu0 %v1362
    %1364 = vmatprep.subr.mxu0 0.0
    %v1365 = vand.u32 %v939, 4294901760
    %v1366 = vsub.f32 %v939, %v1365
    %1367 = vmatpush1.msra.mxu0 %v1366
    %1368 = vmatprep.subr.mxu0 0.0
    %v1369 = vand.u32 %v940, 4294901760
    %v1370 = vsub.f32 %v940, %v1369
    %1371 = vmatpush1.msra.mxu0 %v1370
    %1372 = vmatprep.subr.mxu0 0.0
    %v1373 = vand.u32 %v941, 4294901760
    %v1374 = vsub.f32 %v941, %v1373
    %1375 = vmatpush1.msra.mxu0 %v1374
    %1376 = vmatprep.subr.mxu0 0.0
    %v1377 = vand.u32 %v942, 4294901760
    %v1378 = vsub.f32 %v942, %v1377
    %1379 = vmatpush1.msra.mxu0 %v1378
    %1380 = vmatprep.subr.mxu0 0.0
    %v1381 = vand.u32 %v943, 4294901760
    %v1382 = vsub.f32 %v943, %v1381
    %1383 = vmatpush1.msra.mxu0 %v1382
    %1384 = vmatprep.subr.mxu0 0.0
    %v1385 = vand.u32 %v944, 4294901760
    %v1386 = vsub.f32 %v944, %v1385
    %1387 = vmatpush1.msra.mxu0 %v1386
    %1388 = vmatprep.subr.mxu0 0.0
    %v1389 = vand.u32 %v945, 4294901760
    %v1390 = vsub.f32 %v945, %v1389
    %1391 = vmatpush1.msra.mxu0 %v1390
    %1392 = vmatprep.subr.mxu0 0.0
    %v1393 = vand.u32 %v946, 4294901760
    %v1394 = vsub.f32 %v946, %v1393
    %1395 = vmatpush1.msra.mxu0 %v1394
    %1396 = vmatprep.subr.mxu0 0.0
    %v1397 = vand.u32 %v947, 4294901760
    %v1398 = vsub.f32 %v947, %v1397
    %1399 = vmatpush1.msra.mxu0 %v1398
    %1400 = vmatprep.subr.mxu0 0.0
    %v1401 = vand.u32 %v948, 4294901760
    %v1402 = vsub.f32 %v948, %v1401
    %1403 = vmatpush1.msra.mxu0 %v1402
    %1404 = vmatprep.subr.mxu0 0.0
    %v1405 = vand.u32 %v949, 4294901760
    %v1406 = vsub.f32 %v949, %v1405
    %1407 = vmatpush1.msra.mxu0 %v1406
    %1408 = vmatprep.subr.mxu0 0.0
    %v1409 = vand.u32 %v950, 4294901760
    %v1410 = vsub.f32 %v950, %v1409
    %1411 = vmatpush1.msra.mxu0 %v1410
    %1412 = vmatprep.subr.mxu0 0.0
    %v1413 = vand.u32 %v951, 4294901760
    %v1414 = vsub.f32 %v951, %v1413
    %1415 = vmatpush1.msra.mxu0 %v1414
    %1416 = vmatprep.subr.mxu0 0.0
    %v1417 = vand.u32 %v952, 4294901760
    %v1418 = vsub.f32 %v952, %v1417
    %1419 = vmatpush1.msra.mxu0 %v1418
    %1420 = vmatprep.subr.mxu0 0.0
    %v1421 = vand.u32 %v953, 4294901760
    %v1422 = vsub.f32 %v953, %v1421
    %1423 = vmatpush1.msra.mxu0 %v1422
    %1424 = vmatprep.subr.mxu0 0.0
    %v1425 = vand.u32 %v954, 4294901760
    %v1426 = vsub.f32 %v954, %v1425
    %1427 = vmatpush1.msra.mxu0 %v1426
    %v1428 = vand.u32 %v922, 4294901760
    %v1429 = vsub.f32 %v922, %v1428
    %1430 = vmatprep.mubr.f32.mxu0 %v1429
    %v1431 = vand.u32 %v921, 4294901760
    %v1432 = vsub.f32 %v921, %v1431
    %1433 = vmatmul.mubr.f32.gmra.mrb[0].mxu0 %v1432
    %v1434 = vpop.f32.mrb[0].mxu0
    %v1435 = vadd.f32 %v1297, %v1434
    %v1436 = vpop.f32.mrb[0].mxu0
    %1437 = vdwg.mxu0
    %1438 = vmatprep.subr.mxu0 0.0
    %v1439 = vand.u32 %v923, 4294901760
    %1440 = vmatpush1.msra.mxu0 %v1439
    %1441 = vmatprep.subr.mxu0 0.0
    %v1442 = vand.u32 %v924, 4294901760
    %1443 = vmatpush1.msra.mxu0 %v1442
    %1444 = vmatprep.subr.mxu0 0.0
    %v1445 = vand.u32 %v925, 4294901760
    %1446 = vmatpush1.msra.mxu0 %v1445
    %1447 = vmatprep.subr.mxu0 0.0
    %v1448 = vand.u32 %v926, 4294901760
    %1449 = vmatpush1.msra.mxu0 %v1448
    %1450 = vmatprep.subr.mxu0 0.0
    %v1451 = vand.u32 %v927, 4294901760
    %1452 = vmatpush1.msra.mxu0 %v1451
    %1453 = vmatprep.subr.mxu0 0.0
    %v1454 = vand.u32 %v928, 4294901760
    %1455 = vmatpush1.msra.mxu0 %v1454
    %1456 = vmatprep.subr.mxu0 0.0
    %v1457 = vand.u32 %v929, 4294901760
    %1458 = vmatpush1.msra.mxu0 %v1457
    %1459 = vmatprep.subr.mxu0 0.0
    %v1460 = vand.u32 %v930, 4294901760
    %1461 = vmatpush1.msra.mxu0 %v1460
    %1462 = vmatprep.subr.mxu0 0.0
    %v1463 = vand.u32 %v931, 4294901760
    %1464 = vmatpush1.msra.mxu0 %v1463
    %1465 = vmatprep.subr.mxu0 0.0
    %v1466 = vand.u32 %v932, 4294901760
    %1467 = vmatpush1.msra.mxu0 %v1466
    %1468 = vmatprep.subr.mxu0 0.0
    %v1469 = vand.u32 %v933, 4294901760
    %1470 = vmatpush1.msra.mxu0 %v1469
    %1471 = vmatprep.subr.mxu0 0.0
    %v1472 = vand.u32 %v934, 4294901760
    %1473 = vmatpush1.msra.mxu0 %v1472
    %1474 = vmatprep.subr.mxu0 0.0
    %v1475 = vand.u32 %v935, 4294901760
    %1476 = vmatpush1.msra.mxu0 %v1475
    %1477 = vmatprep.subr.mxu0 0.0
    %v1478 = vand.u32 %v936, 4294901760
    %1479 = vmatpush1.msra.mxu0 %v1478
    %1480 = vmatprep.subr.mxu0 0.0
    %v1481 = vand.u32 %v937, 4294901760
    %1482 = vmatpush1.msra.mxu0 %v1481
    %1483 = vmatprep.subr.mxu0 0.0
    %v1484 = vand.u32 %v938, 4294901760
    %1485 = vmatpush1.msra.mxu0 %v1484
    %1486 = vmatprep.subr.mxu0 0.0
    %v1487 = vand.u32 %v939, 4294901760
    %1488 = vmatpush1.msra.mxu0 %v1487
    %1489 = vmatprep.subr.mxu0 0.0
    %v1490 = vand.u32 %v940, 4294901760
    %1491 = vmatpush1.msra.mxu0 %v1490
    %1492 = vmatprep.subr.mxu0 0.0
    %v1493 = vand.u32 %v941, 4294901760
    %1494 = vmatpush1.msra.mxu0 %v1493
    %1495 = vmatprep.subr.mxu0 0.0
    %v1496 = vand.u32 %v942, 4294901760
    %1497 = vmatpush1.msra.mxu0 %v1496
    %1498 = vmatprep.subr.mxu0 0.0
    %v1499 = vand.u32 %v943, 4294901760
    %1500 = vmatpush1.msra.mxu0 %v1499
    %1501 = vmatprep.subr.mxu0 0.0
    %v1502 = vand.u32 %v944, 4294901760
    %1503 = vmatpush1.msra.mxu0 %v1502
    %1504 = vmatprep.subr.mxu0 0.0
    %v1505 = vand.u32 %v945, 4294901760
    %1506 = vmatpush1.msra.mxu0 %v1505
    %1507 = vmatprep.subr.mxu0 0.0
    %v1508 = vand.u32 %v946, 4294901760
    %1509 = vmatpush1.msra.mxu0 %v1508
    %1510 = vmatprep.subr.mxu0 0.0
    %v1511 = vand.u32 %v947, 4294901760
    %1512 = vmatpush1.msra.mxu0 %v1511
    %1513 = vmatprep.subr.mxu0 0.0
    %v1514 = vand.u32 %v948, 4294901760
    %1515 = vmatpush1.msra.mxu0 %v1514
    %1516 = vmatprep.subr.mxu0 0.0
    %v1517 = vand.u32 %v949, 4294901760
    %1518 = vmatpush1.msra.mxu0 %v1517
    %1519 = vmatprep.subr.mxu0 0.0
    %v1520 = vand.u32 %v950, 4294901760
    %1521 = vmatpush1.msra.mxu0 %v1520
    %1522 = vmatprep.subr.mxu0 0.0
    %v1523 = vand.u32 %v951, 4294901760
    %1524 = vmatpush1.msra.mxu0 %v1523
    %1525 = vmatprep.subr.mxu0 0.0
    %v1526 = vand.u32 %v952, 4294901760
    %1527 = vmatpush1.msra.mxu0 %v1526
    %1528 = vmatprep.subr.mxu0 0.0
    %v1529 = vand.u32 %v953, 4294901760
    %1530 = vmatpush1.msra.mxu0 %v1529
    %1531 = vmatprep.subr.mxu0 0.0
    %v1532 = vand.u32 %v954, 4294901760
    %1533 = vmatpush1.msra.mxu0 %v1532
    %v1534 = vand.u32 %v922, 4294901760
    %v1535 = vsub.f32 %v922, %v1534
    %v1536 = vand.u32 %v1535, 4294901760
    %1537 = vmatprep.mubr.f32.mxu0 %v1536
    %v1538 = vand.u32 %v921, 4294901760
    %v1539 = vsub.f32 %v921, %v1538
    %v1540 = vand.u32 %v1539, 4294901760
    %1541 = vmatmul.mubr.f32.gmra.mrb[0].mxu0 %v1540
    %v1542 = vpop.f32.mrb[0].mxu0
    %v1543 = vadd.f32 %v1435, %v1542
    %v1544 = vpop.f32.mrb[0].mxu0
    %1545 = vdwg.mxu0
    %1546 = vmatprep.subr.mxu0 0.0
    %v1547 = vand.u32 %v923, 4294901760
    %v1548 = vsub.f32 %v923, %v1547
    %v1549 = vand.u32 %v1548, 4294901760
    %1550 = vmatpush1.msra.mxu0 %v1549
    %1551 = vmatprep.subr.mxu0 0.0
    %v1552 = vand.u32 %v924, 4294901760
    %v1553 = vsub.f32 %v924, %v1552
    %v1554 = vand.u32 %v1553, 4294901760
    %1555 = vmatpush1.msra.mxu0 %v1554
    %1556 = vmatprep.subr.mxu0 0.0
    %v1557 = vand.u32 %v925, 4294901760
    %v1558 = vsub.f32 %v925, %v1557
    %v1559 = vand.u32 %v1558, 4294901760
    %1560 = vmatpush1.msra.mxu0 %v1559
    %1561 = vmatprep.subr.mxu0 0.0
    %v1562 = vand.u32 %v926, 4294901760
    %v1563 = vsub.f32 %v926, %v1562
    %v1564 = vand.u32 %v1563, 4294901760
    %1565 = vmatpush1.msra.mxu0 %v1564
    %1566 = vmatprep.subr.mxu0 0.0
    %v1567 = vand.u32 %v927, 4294901760
    %v1568 = vsub.f32 %v927, %v1567
    %v1569 = vand.u32 %v1568, 4294901760
    %1570 = vmatpush1.msra.mxu0 %v1569
    %1571 = vmatprep.subr.mxu0 0.0
    %v1572 = vand.u32 %v928, 4294901760
    %v1573 = vsub.f32 %v928, %v1572
    %v1574 = vand.u32 %v1573, 4294901760
    %1575 = vmatpush1.msra.mxu0 %v1574
    %1576 = vmatprep.subr.mxu0 0.0
    %v1577 = vand.u32 %v929, 4294901760
    %v1578 = vsub.f32 %v929, %v1577
    %v1579 = vand.u32 %v1578, 4294901760
    %1580 = vmatpush1.msra.mxu0 %v1579
    %1581 = vmatprep.subr.mxu0 0.0
    %v1582 = vand.u32 %v930, 4294901760
    %v1583 = vsub.f32 %v930, %v1582
    %v1584 = vand.u32 %v1583, 4294901760
    %1585 = vmatpush1.msra.mxu0 %v1584
    %1586 = vmatprep.subr.mxu0 0.0
    %v1587 = vand.u32 %v931, 4294901760
    %v1588 = vsub.f32 %v931, %v1587
    %v1589 = vand.u32 %v1588, 4294901760
    %1590 = vmatpush1.msra.mxu0 %v1589
    %1591 = vmatprep.subr.mxu0 0.0
    %v1592 = vand.u32 %v932, 4294901760
    %v1593 = vsub.f32 %v932, %v1592
    %v1594 = vand.u32 %v1593, 4294901760
    %1595 = vmatpush1.msra.mxu0 %v1594
    %1596 = vmatprep.subr.mxu0 0.0
    %v1597 = vand.u32 %v933, 4294901760
    %v1598 = vsub.f32 %v933, %v1597
    %v1599 = vand.u32 %v1598, 4294901760
    %1600 = vmatpush1.msra.mxu0 %v1599
    %1601 = vmatprep.subr.mxu0 0.0
    %v1602 = vand.u32 %v934, 4294901760
    %v1603 = vsub.f32 %v934, %v1602
    %v1604 = vand.u32 %v1603, 4294901760
    %1605 = vmatpush1.msra.mxu0 %v1604
    %1606 = vmatprep.subr.mxu0 0.0
    %v1607 = vand.u32 %v935, 4294901760
    %v1608 = vsub.f32 %v935, %v1607
    %v1609 = vand.u32 %v1608, 4294901760
    %1610 = vmatpush1.msra.mxu0 %v1609
    %1611 = vmatprep.subr.mxu0 0.0
    %v1612 = vand.u32 %v936, 4294901760
    %v1613 = vsub.f32 %v936, %v1612
    %v1614 = vand.u32 %v1613, 4294901760
    %1615 = vmatpush1.msra.mxu0 %v1614
    %1616 = vmatprep.subr.mxu0 0.0
    %v1617 = vand.u32 %v937, 4294901760
    %v1618 = vsub.f32 %v937, %v1617
    %v1619 = vand.u32 %v1618, 4294901760
    %1620 = vmatpush1.msra.mxu0 %v1619
    %1621 = vmatprep.subr.mxu0 0.0
    %v1622 = vand.u32 %v938, 4294901760
    %v1623 = vsub.f32 %v938, %v1622
    %v1624 = vand.u32 %v1623, 4294901760
    %1625 = vmatpush1.msra.mxu0 %v1624
    %1626 = vmatprep.subr.mxu0 0.0
    %v1627 = vand.u32 %v939, 4294901760
    %v1628 = vsub.f32 %v939, %v1627
    %v1629 = vand.u32 %v1628, 4294901760
    %1630 = vmatpush1.msra.mxu0 %v1629
    %1631 = vmatprep.subr.mxu0 0.0
    %v1632 = vand.u32 %v940, 4294901760
    %v1633 = vsub.f32 %v940, %v1632
    %v1634 = vand.u32 %v1633, 4294901760
    %1635 = vmatpush1.msra.mxu0 %v1634
    %1636 = vmatprep.subr.mxu0 0.0
    %v1637 = vand.u32 %v941, 4294901760
    %v1638 = vsub.f32 %v941, %v1637
    %v1639 = vand.u32 %v1638, 4294901760
    %1640 = vmatpush1.msra.mxu0 %v1639
    %1641 = vmatprep.subr.mxu0 0.0
    %v1642 = vand.u32 %v942, 4294901760
    %v1643 = vsub.f32 %v942, %v1642
    %v1644 = vand.u32 %v1643, 4294901760
    %1645 = vmatpush1.msra.mxu0 %v1644
    %1646 = vmatprep.subr.mxu0 0.0
    %v1647 = vand.u32 %v943, 4294901760
    %v1648 = vsub.f32 %v943, %v1647
    %v1649 = vand.u32 %v1648, 4294901760
    %1650 = vmatpush1.msra.mxu0 %v1649
    %1651 = vmatprep.subr.mxu0 0.0
    %v1652 = vand.u32 %v944, 4294901760
    %v1653 = vsub.f32 %v944, %v1652
    %v1654 = vand.u32 %v1653, 4294901760
    %1655 = vmatpush1.msra.mxu0 %v1654
    %1656 = vmatprep.subr.mxu0 0.0
    %v1657 = vand.u32 %v945, 4294901760
    %v1658 = vsub.f32 %v945, %v1657
    %v1659 = vand.u32 %v1658, 4294901760
    %1660 = vmatpush1.msra.mxu0 %v1659
    %1661 = vmatprep.subr.mxu0 0.0
    %v1662 = vand.u32 %v946, 4294901760
    %v1663 = vsub.f32 %v946, %v1662
    %v1664 = vand.u32 %v1663, 4294901760
    %1665 = vmatpush1.msra.mxu0 %v1664
    %1666 = vmatprep.subr.mxu0 0.0
    %v1667 = vand.u32 %v947, 4294901760
    %v1668 = vsub.f32 %v947, %v1667
    %v1669 = vand.u32 %v1668, 4294901760
    %1670 = vmatpush1.msra.mxu0 %v1669
    %1671 = vmatprep.subr.mxu0 0.0
    %v1672 = vand.u32 %v948, 4294901760
    %v1673 = vsub.f32 %v948, %v1672
    %v1674 = vand.u32 %v1673, 4294901760
    %1675 = vmatpush1.msra.mxu0 %v1674
    %1676 = vmatprep.subr.mxu0 0.0
    %v1677 = vand.u32 %v949, 4294901760
    %v1678 = vsub.f32 %v949, %v1677
    %v1679 = vand.u32 %v1678, 4294901760
    %1680 = vmatpush1.msra.mxu0 %v1679
    %1681 = vmatprep.subr.mxu0 0.0
    %v1682 = vand.u32 %v950, 4294901760
    %v1683 = vsub.f32 %v950, %v1682
    %v1684 = vand.u32 %v1683, 4294901760
    %1685 = vmatpush1.msra.mxu0 %v1684
    %1686 = vmatprep.subr.mxu0 0.0
    %v1687 = vand.u32 %v951, 4294901760
    %v1688 = vsub.f32 %v951, %v1687
    %v1689 = vand.u32 %v1688, 4294901760
    %1690 = vmatpush1.msra.mxu0 %v1689
    %1691 = vmatprep.subr.mxu0 0.0
    %v1692 = vand.u32 %v952, 4294901760
    %v1693 = vsub.f32 %v952, %v1692
    %v1694 = vand.u32 %v1693, 4294901760
    %1695 = vmatpush1.msra.mxu0 %v1694
    %1696 = vmatprep.subr.mxu0 0.0
    %v1697 = vand.u32 %v953, 4294901760
    %v1698 = vsub.f32 %v953, %v1697
    %v1699 = vand.u32 %v1698, 4294901760
    %1700 = vmatpush1.msra.mxu0 %v1699
    %1701 = vmatprep.subr.mxu0 0.0
    %v1702 = vand.u32 %v954, 4294901760
    %v1703 = vsub.f32 %v954, %v1702
    %v1704 = vand.u32 %v1703, 4294901760
    %1705 = vmatpush1.msra.mxu0 %v1704
    %v1706 = vand.u32 %v922, 4294901760
    %1707 = vmatprep.mubr.f32.mxu0 %v1706
    %v1708 = vand.u32 %v921, 4294901760
    %1709 = vmatmul.mubr.f32.gmra.mrb[0].mxu0 %v1708
    %v1710 = vpop.f32.mrb[0].mxu0
    %v1711 = vadd.f32 %v1543, %v1710
    %v1712 = vpop.f32.mrb[0].mxu0
    %1713 = vdwg.mxu0
    %1714 = vmatprep.subr.mxu0 0.0
    %v1715 = vand.u32 %v923, 4294901760
    %1716 = vmatpush1.msra.mxu0 %v1715
    %1717 = vmatprep.subr.mxu0 0.0
    %v1718 = vand.u32 %v924, 4294901760
    %1719 = vmatpush1.msra.mxu0 %v1718
    %1720 = vmatprep.subr.mxu0 0.0
    %v1721 = vand.u32 %v925, 4294901760
    %1722 = vmatpush1.msra.mxu0 %v1721
    %1723 = vmatprep.subr.mxu0 0.0
    %v1724 = vand.u32 %v926, 4294901760
    %1725 = vmatpush1.msra.mxu0 %v1724
    %1726 = vmatprep.subr.mxu0 0.0
    %v1727 = vand.u32 %v927, 4294901760
    %1728 = vmatpush1.msra.mxu0 %v1727
    %1729 = vmatprep.subr.mxu0 0.0
    %v1730 = vand.u32 %v928, 4294901760
    %1731 = vmatpush1.msra.mxu0 %v1730
    %1732 = vmatprep.subr.mxu0 0.0
    %v1733 = vand.u32 %v929, 4294901760
    %1734 = vmatpush1.msra.mxu0 %v1733
    %1735 = vmatprep.subr.mxu0 0.0
    %v1736 = vand.u32 %v930, 4294901760
    %1737 = vmatpush1.msra.mxu0 %v1736
    %1738 = vmatprep.subr.mxu0 0.0
    %v1739 = vand.u32 %v931, 4294901760
    %1740 = vmatpush1.msra.mxu0 %v1739
    %1741 = vmatprep.subr.mxu0 0.0
    %v1742 = vand.u32 %v932, 4294901760
    %1743 = vmatpush1.msra.mxu0 %v1742
    %1744 = vmatprep.subr.mxu0 0.0
    %v1745 = vand.u32 %v933, 4294901760
    %1746 = vmatpush1.msra.mxu0 %v1745
    %1747 = vmatprep.subr.mxu0 0.0
    %v1748 = vand.u32 %v934, 4294901760
    %1749 = vmatpush1.msra.mxu0 %v1748
    %1750 = vmatprep.subr.mxu0 0.0
    %v1751 = vand.u32 %v935, 4294901760
    %1752 = vmatpush1.msra.mxu0 %v1751
    %1753 = vmatprep.subr.mxu0 0.0
    %v1754 = vand.u32 %v936, 4294901760
    %1755 = vmatpush1.msra.mxu0 %v1754
    %1756 = vmatprep.subr.mxu0 0.0
    %v1757 = vand.u32 %v937, 4294901760
    %1758 = vmatpush1.msra.mxu0 %v1757
    %1759 = vmatprep.subr.mxu0 0.0
    %v1760 = vand.u32 %v938, 4294901760
    %1761 = vmatpush1.msra.mxu0 %v1760
    %1762 = vmatprep.subr.mxu0 0.0
    %v1763 = vand.u32 %v939, 4294901760
    %1764 = vmatpush1.msra.mxu0 %v1763
    %1765 = vmatprep.subr.mxu0 0.0
    %v1766 = vand.u32 %v940, 4294901760
    %1767 = vmatpush1.msra.mxu0 %v1766
    %1768 = vmatprep.subr.mxu0 0.0
    %v1769 = vand.u32 %v941, 4294901760
    %1770 = vmatpush1.msra.mxu0 %v1769
    %1771 = vmatprep.subr.mxu0 0.0
    %v1772 = vand.u32 %v942, 4294901760
    %1773 = vmatpush1.msra.mxu0 %v1772
    %1774 = vmatprep.subr.mxu0 0.0
    %v1775 = vand.u32 %v943, 4294901760
    %1776 = vmatpush1.msra.mxu0 %v1775
    %1777 = vmatprep.subr.mxu0 0.0
    %v1778 = vand.u32 %v944, 4294901760
    %1779 = vmatpush1.msra.mxu0 %v1778
    %1780 = vmatprep.subr.mxu0 0.0
    %v1781 = vand.u32 %v945, 4294901760
    %1782 = vmatpush1.msra.mxu0 %v1781
    %1783 = vmatprep.subr.mxu0 0.0
    %v1784 = vand.u32 %v946, 4294901760
    %1785 = vmatpush1.msra.mxu0 %v1784
    %1786 = vmatprep.subr.mxu0 0.0
    %v1787 = vand.u32 %v947, 4294901760
    %1788 = vmatpush1.msra.mxu0 %v1787
    %1789 = vmatprep.subr.mxu0 0.0
    %v1790 = vand.u32 %v948, 4294901760
    %1791 = vmatpush1.msra.mxu0 %v1790
    %1792 = vmatprep.subr.mxu0 0.0
    %v1793 = vand.u32 %v949, 4294901760
    %1794 = vmatpush1.msra.mxu0 %v1793
    %1795 = vmatprep.subr.mxu0 0.0
    %v1796 = vand.u32 %v950, 4294901760
    %1797 = vmatpush1.msra.mxu0 %v1796
    %1798 = vmatprep.subr.mxu0 0.0
    %v1799 = vand.u32 %v951, 4294901760
    %1800 = vmatpush1.msra.mxu0 %v1799
    %1801 = vmatprep.subr.mxu0 0.0
    %v1802 = vand.u32 %v952, 4294901760
    %1803 = vmatpush1.msra.mxu0 %v1802
    %1804 = vmatprep.subr.mxu0 0.0
    %v1805 = vand.u32 %v953, 4294901760
    %1806 = vmatpush1.msra.mxu0 %v1805
    %1807 = vmatprep.subr.mxu0 0.0
    %v1808 = vand.u32 %v954, 4294901760
    %1809 = vmatpush1.msra.mxu0 %v1808
    %v1810 = vand.u32 %v922, 4294901760
    %1811 = vmatprep.mubr.f32.mxu0 %v1810
    %v1812 = vand.u32 %v921, 4294901760
    %1813 = vmatmul.mubr.f32.gmra.mrb[0].mxu0 %v1812
    %v1814 = vpop.f32.mrb[0].mxu0
    %v1815 = vadd.f32 %v1711, %v1814
    %v1816 = vpop.f32.mrb[0].mxu0
    %1817 = vdwg.mxu0
    %v1818 = vmul.f32 %v1815, 0.5
    %v1819 = vtanh.pop %v1818
    %v1820 = vadd.f32 %v1819, 1.0
    %v1821 = vmul.f32 %v1820, 0.5
    %vm1822 = vcmask 253952
    %1823 = vst.msk [vmem:[#allocation2] sm:$0x1] %vm1822, %v1821
    // Predicated region
    $region22: #{tpu_custom_call.1} parent=1 // pred_check
      _
    $region23: #{tpu_custom_call.1} parent=1 // pred_check_branch
      %1825 = sbr.rel (0) target = $region25
    $region24: #{tpu_custom_call.1} parent=1 // pred_region
      %s1827 = ssub.s32 16, 16
      %1828 = vsyncadd [#allocation3], %s1827
      %s1830 = sshll.u32 [#allocation2], 4
      %s1831 = int_to_ptr.vmem [resolvable:$true] %s1830
      %1833 = dma.vmem_to_hbm [thread:$0]  %s1831, 16, %s5, [#allocation3]
    $region25: #{tpu_custom_call.1} parent=1 // pred_fallthru
      _
    // Predicated region
    $region26: #{tpu_custom_call.1} parent=1 // pred_check
      _
    $region27: #{tpu_custom_call.1} parent=1 // pred_check_branch
      %1835 = sbr.rel (0) target = $region29
    $region28: #{tpu_custom_call.1} parent=1 // pred_region
      %1836 = dma.done [#allocation3], 16
    $region29: #{tpu_custom_call.1} parent=1 // pred_fallthru
      _
    %1837 = vsyncpa [#allocation3], 1

</llo_original>
